<compile_context>
chip_gen: v7x
topology: tpu7x:2x2x1
jax: 0.10.0
libtpu: 0.0.40
codegen_flags: <defaults>
</compile_context>

<pallas_src>
import functools
import math

import jax
import jax.numpy as jnp
from jax.experimental import pallas as pl
from jax.experimental.pallas import tpu as pltpu


def _round_up(x, m):
    return ((x + m - 1) // m) * m


_VMEM_WORKSET_BUDGET = 22 * 1024 * 1024   # per-call working-set target (fits every gen)
_VMEM_LIMIT_BYTES = 32 * 1024 * 1024      # <= v7x 64 MiB physical; raises v5e's 16 MiB default
_TM_MAX = 8192


# ----------------------------- Pallas kernel --------------------------------
def _matmul_bias_act_kernel(a_ref, w_ref, b_ref, o_ref, *, relu):
    # bf16 x bf16 matmul with f32 accumulation on the MXU; bias + ReLU in f32.
    acc = jnp.dot(a_ref[...], w_ref[...], preferred_element_type=jnp.float32)
    acc = acc + b_ref[...]
    if relu:
        acc = jnp.maximum(acc, 0.0)
    o_ref[...] = acc.astype(o_ref.dtype)


@functools.lru_cache(maxsize=None)
def _single_buffer_supported():
    """Probe once whether BlockSpec(pipeline_mode=pl.Buffered(1)) lowers/runs here."""
    try:
        def _k(x_ref, o_ref):
            o_ref[...] = x_ref[...] + 1.0

        fn = pl.pallas_call(
            _k,
            out_shape=jax.ShapeDtypeStruct((8, 128), jnp.float32),
            grid=(2,),
            in_specs=[pl.BlockSpec((8, 128), lambda i: (0, 0),
                                   pipeline_mode=pl.Buffered(1))],
            out_specs=pl.BlockSpec((8, 128), lambda i: (0, 0)),
        )
        jax.block_until_ready(fn(jnp.zeros((8, 128), jnp.float32)))
        return True
    except Exception:
        return False


def _choose_tm(M, K, Np, a_bytes, o_bytes, w_single_buffered):
    """Largest row tile keeping 2*A_tile + 2*out_tile + W + bias under the budget."""
    w_bufs = 1 if w_single_buffered else 2
    fixed = w_bufs * (K * Np * 2 + Np * 4)              # bf16 W + f32 bias
    per_row = 2 * (K * a_bytes + Np * o_bytes)          # double-buffered A and out
    tm = max(8, (_VMEM_WORKSET_BUDGET - fixed) // per_row)
    tm = min(tm, _TM_MAX)
    # Guarantee >=2 grid steps when there is enough work, so the "parallel"
    # grid axis can actually shard across v7x's two TensorCores.
    tm = min(tm, max(8, _round_up((M + 1) // 2, 8)))
    tm = max(8, (tm // 8) * 8)
    if tm >= M:
        tm = M
    return int(tm)


def matmul_bias_act(a, w, b, *, relu, out_dtype):
    """Fused (a @ w + b) [+ReLU], tiled over M; weights stay resident in VMEM."""
    M, K = a.shape
    K2, Np = w.shape
    assert K == K2 and b.shape == (1, Np)

    a_bytes = a.dtype.itemsize
    o_bytes = jnp.dtype(out_dtype).itemsize
    single_buf = _single_buffer_supported()
    tm = _choose_tm(M, K, Np, a_bytes, o_bytes, single_buf)
    grid = (pl.cdiv(M, tm),)

    if single_buf:
        w_spec = pl.BlockSpec((K, Np), lambda i: (0, 0), pipeline_mode=pl.Buffered(1))
        b_spec = pl.BlockSpec((1, Np), lambda i: (0, 0), pipeline_mode=pl.Buffered(1))
    else:
        w_spec = pl.BlockSpec((K, Np), lambda i: (0, 0))
        b_spec = pl.BlockSpec((1, Np), lambda i: (0, 0))

    flops = 2 * M * K * Np
    bytes_accessed = int(a.size * a_bytes + w.size * w.dtype.itemsize
                         + b.size * b.dtype.itemsize + M * Np * o_bytes)

    return pl.pallas_call(
        functools.partial(_matmul_bias_act_kernel, relu=relu),
        out_shape=jax.ShapeDtypeStruct((M, Np), out_dtype),
        grid=grid,
        in_specs=[pl.BlockSpec((tm, K), lambda i: (i, 0)), w_spec, b_spec],
        out_specs=pl.BlockSpec((tm, Np), lambda i: (i, 0)),
        compiler_params=pltpu.CompilerParams(
            dimension_semantics=("parallel",),
            vmem_limit_bytes=_VMEM_LIMIT_BYTES),
        cost_estimate=pl.CostEstimate(
            flops=flops, transcendentals=0, bytes_accessed=bytes_accessed),
    )(a, w, b)


# ------------------------------- glue (JAX) ----------------------------------
def _im2col(x_nhwc, kh, kw, stride, pad_taps):
    """Valid-padding patches: (N,H,W,C) -> (N*Ho*Wo, pad_taps*C).

    The K-alignment zero pad is folded into the same materialization (extra zero
    taps at the end), so no separate pad pass over the patch matrix is needed.
    TODO(synk): replace with an in-kernel kh*kw tap-sum so this matrix is never
    materialized in HBM.
    """
    N, H, W, C = x_nhwc.shape
    Ho = (H - kh) // stride + 1
    Wo = (W - kw) // stride + 1
    cols = []
    for i in range(kh):
        for j in range(kw):
            cols.append(
                x_nhwc[:, i:i + (Ho - 1) * stride + 1:stride,
                       j:j + (Wo - 1) * stride + 1:stride, :])
    patches = jnp.stack(cols, axis=3)                       # (N, Ho, Wo, kh*kw, C)
    if pad_taps > kh * kw:
        patches = jnp.pad(patches,
                          ((0, 0), (0, 0), (0, 0), (0, pad_taps - kh * kw), (0, 0)))
    return patches.reshape(N * Ho * Wo, pad_taps * C), Ho, Wo


def conv2d_via_pallas(x_nhwc, layer, stride):
    N = x_nhwc.shape[0]
    a, Ho, Wo = _im2col(x_nhwc, layer["kh"], layer["kw"], stride, layer["pad_taps"])
    y = matmul_bias_act(a, layer["w"], layer["b"], relu=True, out_dtype=jnp.bfloat16)
    return y.reshape(N, Ho, Wo, layer["n"])


def nature_cnn_forward(x_nchw, packed):
    c1, c2, c3, lin = packed["c1"], packed["c2"], packed["c3"], packed["lin"]
    N = x_nchw.shape[0]
    # Single input-layout transform: NCHW -> NHWC (+ channel zero pad if needed), bf16.
    x = jnp.transpose(x_nchw, (0, 2, 3, 1))
    if x.shape[-1] != c1["cin_p"]:
        x = jnp.pad(x, ((0, 0), (0, 0), (0, 0), (0, c1["cin_p"] - x.shape[-1])))
    x = x.astype(jnp.bfloat16)

    x = conv2d_via_pallas(x, c1, stride=4)
    x = conv2d_via_pallas(x, c2, stride=2)
    x = conv2d_via_pallas(x, c3, stride=1)
    # TODO(synk): fuse conv3 + Linear into one pallas_call (conv3 tile kept in VMEM).

    # Linear: NHWC flatten is a plain reshape; the weight rows were permuted from
    # PyTorch's (c,h,w) flatten order to (h,w,c) once at pack time.
    a = x.reshape(N, -1)
    return matmul_bias_act(a, lin["w"], lin["b"], relu=False, out_dtype=jnp.float32)


# ----------------------------- parameter packing ------------------------------
def _min_k_padding(kh, kw, cin, allow_cin_pad):
    """Smallest (cin_p, pad_taps) with pad_taps * cin_p a multiple of 128."""
    best = None
    cin_options = range(cin, cin + 128) if allow_cin_pad else (cin,)
    for cp in cin_options:
        m = 128 // math.gcd(cp, 128)
        taps = _round_up(kh * kw, m)
        k = taps * cp
        if best is None or k < best[0]:
            best = (k, cp, taps)
    return best[1], best[2]


def pack_conv(w_oihw, b, *, allow_cin_pad=False):
    """One-time conv weight packing: (Cout,Cin,kh,kw) -> (K, Cout) bf16 with the
    K axis in (tap, cin_padded) order (matches _im2col) and K % 128 == 0."""
    Cout, Cin, kh, kw = w_oihw.shape
    cin_p, pad_taps = _min_k_padding(kh, kw, Cin, allow_cin_pad)
    wmat = jnp.transpose(w_oihw, (2, 3, 1, 0)).reshape(kh * kw, Cin, Cout)
    wmat = jnp.pad(wmat, ((0, pad_taps - kh * kw), (0, cin_p - Cin), (0, 0)))
    wmat = wmat.reshape(pad_taps * cin_p, Cout).astype(jnp.bfloat16)
    bias = b.astype(jnp.float32).reshape(1, Cout)
    return {"w": wmat, "b": bias, "kh": kh, "kw": kw,
            "cin_p": cin_p, "pad_taps": pad_taps, "n": Cout}


def pack_linear(wl, bl, c3_channels):
    """PyTorch (out_dim, C*H*W) -> (K, out_dim) bf16 with rows permuted ONCE from
    the (c,h,w) flatten order to (h,w,c) so the NHWC activation reshape is direct."""
    out_dim, K = wl.shape
    hw = K // c3_channels
    wmat = wl.reshape(out_dim, c3_channels, hw).transpose(0, 2, 1).reshape(out_dim, K)
    wmat = wmat.T.astype(jnp.bfloat16)
    bias = bl.astype(jnp.float32).reshape(1, out_dim)
    return {"w": wmat, "b": bias, "n": out_dim}


def pack_params(p):
    _single_buffer_supported()   # prime the Buffered(1) probe eagerly, outside jit
    return {
        "c1": pack_conv(p["w1"], p["b1"], allow_cin_pad=True),
        "c2": pack_conv(p["w2"], p["b2"]),
        "c3": pack_conv(p["w3"], p["b3"]),
        "lin": pack_linear(p["wl"], p["bl"], c3_channels=p["w3"].shape[0]),
    }


def init_params(key, in_dim, n_flatten, out_dim):
    ks = jax.random.split(key, 4)

    def w_init(k, shape, fan_in):
        return jax.random.normal(k, shape, jnp.float32) / jnp.sqrt(fan_in)

    return {
        "w1": w_init(ks[0], (32, in_dim, 8, 8), in_dim * 8 * 8),
        "b1": jnp.zeros((32,), jnp.float32),
        "w2": w_init(ks[1], (64, 32, 4, 4), 32 * 4 * 4),
        "b2": jnp.zeros((64,), jnp.float32),
        "w3": w_init(ks[2], (64, 64, 3, 3), 64 * 3 * 3),
        "b3": jnp.zeros((64,), jnp.float32),
        "wl": w_init(ks[3], (out_dim, n_flatten), n_flatten),
        "bl": jnp.zeros((out_dim,), jnp.float32),
    }


def _reference_forward(x, p):
    """Pure-JAX f32 reference matching the PyTorch module exactly."""
    y = x
    for wk, bk, s in (("w1", "b1", 4), ("w2", "b2", 2), ("w3", "b3", 1)):
        y = jax.lax.conv_general_dilated(
            y, p[wk], window_strides=(s, s), padding="VALID",
            dimension_numbers=("NCHW", "OIHW", "NCHW"))
        y = jnp.maximum(y + p[bk].reshape(1, -1, 1, 1), 0.0)
    y = y.reshape(y.shape[0], -1)
    return y @ p["wl"].T + p["bl"]


if __name__ == "__main__":
    # Smallest spatial size with a non-trivial flatten: 44 survives the stack as
    # 44 -(8,s4)-> 10 -(4,s2)-> 4 -(3,s1)-> 2, so n_flatten = 64 * 2 * 2 = 256.
    batch, in_dim, spatial, out_dim = 2, 4, 44, 32
    h1 = (spatial - 8) // 4 + 1
    h2 = (h1 - 4) // 2 + 1
    h3 = h2 - 2
    n_flatten = 64 * h3 * h3

    key = jax.random.PRNGKey(0)
    k_x, k_p = jax.random.split(key)
    x = jax.random.normal(k_x, (batch, in_dim, spatial, spatial), jnp.float32)
    params = init_params(k_p, in_dim, n_flatten, out_dim)
    packed = pack_params(params)          # one-time weight permute/pad/bf16 cast

    fwd = jax.jit(lambda inp: nature_cnn_forward(inp, packed))
    out = fwd(x)
    jax.block_until_ready(out)
    assert out.shape == (batch, out_dim), out.shape
    assert out.dtype == jnp.float32

    # bf16 activations/weights with f32 accumulation -> loose tolerance vs f32 ref.
    ref = _reference_forward(x, params)
    max_err = float(jnp.max(jnp.abs(out - ref)))
    assert bool(jnp.allclose(out, ref, rtol=5e-2, atol=5e-2)), max_err
    print("KERNEL_OK")
</pallas_src>

<mosaic_0001>
module attributes {stable_mosaic.version = 11 : i64} {
  func.func @_k(%arg0: i32, %arg1: memref<8x128xf32, #tpu.memory_space<vmem>>, %arg2: memref<8x128xf32, #tpu.memory_space<vmem>>) attributes {dimension_semantics = [#tpu.dimension_semantics<arbitrary>], iteration_bounds = array<i64: 2>, scalar_prefetch = 0 : i64, scratch_operands = 0 : i64, tpu.core_type = #tpu.core_type<tc>, window_params = [{pipeline_mode = #tpu.pipeline_mode<synchronous>, transform_indices = @transform_0, window_bounds = array<i64: 8, 128>}, {pipeline_mode = #tpu.pipeline_mode<synchronous>, transform_indices = @transform_1, window_bounds = array<i64: 8, 128>}]} {
    %c0 = arith.constant 0 : index
    %c0_0 = arith.constant 0 : index
    %0 = vector.load %arg1[%c0, %c0_0] : memref<8x128xf32, #tpu.memory_space<vmem>>, vector<8x128xf32>
    %cst = arith.constant 1.000000e+00 : f32
    %1 = vector.broadcast %cst : f32 to vector<8x128xf32>
    %2 = arith.addf %0, %1 : vector<8x128xf32>
    %c0_1 = arith.constant 0 : index
    %c0_2 = arith.constant 0 : index
    %3 = vector.load %arg2[%c0_1, %c0_2] : memref<8x128xf32, #tpu.memory_space<vmem>>, vector<8x128xf32>
    tpu.vector_store %arg2[%c0_1, %c0_2], %2 {strides = array<i32>} : memref<8x128xf32, #tpu.memory_space<vmem>>, vector<8x128xf32>,
    return
  }
  func.func @transform_0(%arg0: i32) -> (i32, i32) {
    %c0_i32 = arith.constant 0 : i32
    %c0_i32_0 = arith.constant 0 : i32
    %c0_i32_1 = arith.constant 0 : i32
    return %c0_i32, %c0_i32_0 : i32, i32
  }
  func.func @transform_1(%arg0: i32) -> (i32, i32) {
    %c0_i32 = arith.constant 0 : i32
    %c0_i32_0 = arith.constant 0 : i32
    %c0_i32_1 = arith.constant 0 : i32
    return %c0_i32, %c0_i32_0 : i32, i32
  }
}

module attributes {stable_mosaic.version = 11 : i64} {
  func.func @_matmul_bias_act_kernel(%arg0: i32, %arg1: memref<104x256xbf16, #tpu.memory_space<vmem>>, %arg2: memref<256x32xbf16, #tpu.memory_space<vmem>>, %arg3: memref<1x32xf32, #tpu.memory_space<vmem>>, %arg4: memref<104x32xbf16, #tpu.memory_space<vmem>>) attributes {dimension_semantics = [#tpu.dimension_semantics<parallel>], iteration_bounds = array<i64: 2>, scalar_prefetch = 0 : i64, scratch_operands = 0 : i64, tpu.core_type = #tpu.core_type<tc>, window_params = [{transform_indices = @transform_0, window_bounds = array<i64: 104, 256>}, {pipeline_mode = #tpu.pipeline_mode<synchronous>, transform_indices = @transform_1, window_bounds = array<i64: 256, 32>}, {pipeline_mode = #tpu.pipeline_mode<synchronous>, transform_indices = @transform_2, window_bounds = array<i64: 1, 32>}, {transform_indices = @transform_3, window_bounds = array<i64: 104, 32>}]} {
    %c0 = arith.constant 0 : index
    %c0_0 = arith.constant 0 : index
    %0 = vector.load %arg1[%c0, %c0_0] : memref<104x256xbf16, #tpu.memory_space<vmem>>, vector<104x256xbf16>
    %c0_1 = arith.constant 0 : index
    %c0_2 = arith.constant 0 : index
    %1 = vector.load %arg2[%c0_1, %c0_2] : memref<256x32xbf16, #tpu.memory_space<vmem>>, vector<256x32xbf16>
    %cst = arith.constant dense<0.000000e+00> : vector<104x32xf32>
    %2 = tpu.matmul %0, %1, %cst {dimension_numbers = #tpu.dot_dimension_numbers<[1], [0], [0], [1], [0, 0, 1, 1], [], []>} : vector<104x256xbf16>, vector<256x32xbf16>, vector<104x32xf32> -> vector<104x32xf32>
    %c0_3 = arith.constant 0 : index
    %c0_4 = arith.constant 0 : index
    %3 = vector.load %arg3[%c0_3, %c0_4] : memref<1x32xf32, #tpu.memory_space<vmem>>, vector<1x32xf32>
    %4 = vector.broadcast %3 : vector<1x32xf32> to vector<104x32xf32>
    %5 = arith.addf %2, %4 : vector<104x32xf32>
    %cst_5 = arith.constant 0.000000e+00 : f32
    %6 = vector.broadcast %cst_5 : f32 to vector<104x32xf32>
    %7 = arith.maximumf %5, %6 : vector<104x32xf32>
    %8 = arith.truncf %7 : vector<104x32xf32> to vector<104x32xbf16>
    %c0_6 = arith.constant 0 : index
    %c0_7 = arith.constant 0 : index
    %9 = vector.load %arg4[%c0_6, %c0_7] : memref<104x32xbf16, #tpu.memory_space<vmem>>, vector<104x32xbf16>
    tpu.vector_store %arg4[%c0_6, %c0_7], %8 {strides = array<i32>} : memref<104x32xbf16, #tpu.memory_space<vmem>>, vector<104x32xbf16>,
    return
  }
  func.func @transform_0(%arg0: i32) -> (i32, i32) {
    %c0_i32 = arith.constant 0 : i32
    %c0_i32_0 = arith.constant 0 : i32
    return %arg0, %c0_i32 : i32, i32
  }
  func.func @transform_1(%arg0: i32) -> (i32, i32) {
    %c0_i32 = arith.constant 0 : i32
    %c0_i32_0 = arith.constant 0 : i32
    %c0_i32_1 = arith.constant 0 : i32
    return %c0_i32, %c0_i32_0 : i32, i32
  }
  func.func @transform_2(%arg0: i32) -> (i32, i32) {
    %c0_i32 = arith.constant 0 : i32
    %c0_i32_0 = arith.constant 0 : i32
    %c0_i32_1 = arith.constant 0 : i32
    return %c0_i32, %c0_i32_0 : i32, i32
  }
  func.func @transform_3(%arg0: i32) -> (i32, i32) {
    %c0_i32 = arith.constant 0 : i32
    %c0_i32_0 = arith.constant 0 : i32
    return %arg0, %c0_i32 : i32, i32
  }
}

module attributes {stable_mosaic.version = 11 : i64} {
  func.func @_matmul_bias_act_kernel(%arg0: i32, %arg1: memref<16x512xbf16, #tpu.memory_space<vmem>>, %arg2: memref<512x64xbf16, #tpu.memory_space<vmem>>, %arg3: memref<1x64xf32, #tpu.memory_space<vmem>>, %arg4: memref<16x64xbf16, #tpu.memory_space<vmem>>) attributes {dimension_semantics = [#tpu.dimension_semantics<parallel>], iteration_bounds = array<i64: 2>, scalar_prefetch = 0 : i64, scratch_operands = 0 : i64, tpu.core_type = #tpu.core_type<tc>, window_params = [{transform_indices = @transform_0, window_bounds = array<i64: 16, 512>}, {pipeline_mode = #tpu.pipeline_mode<synchronous>, transform_indices = @transform_1, window_bounds = array<i64: 512, 64>}, {pipeline_mode = #tpu.pipeline_mode<synchronous>, transform_indices = @transform_2, window_bounds = array<i64: 1, 64>}, {transform_indices = @transform_3, window_bounds = array<i64: 16, 64>}]} {
    %c0 = arith.constant 0 : index
    %c0_0 = arith.constant 0 : index
    %0 = vector.load %arg1[%c0, %c0_0] : memref<16x512xbf16, #tpu.memory_space<vmem>>, vector<16x512xbf16>
    %c0_1 = arith.constant 0 : index
    %c0_2 = arith.constant 0 : index
    %1 = vector.load %arg2[%c0_1, %c0_2] : memref<512x64xbf16, #tpu.memory_space<vmem>>, vector<512x64xbf16>
    %cst = arith.constant dense<0.000000e+00> : vector<16x64xf32>
    %2 = tpu.matmul %0, %1, %cst {dimension_numbers = #tpu.dot_dimension_numbers<[1], [0], [0], [1], [0, 0, 1, 1], [], []>} : vector<16x512xbf16>, vector<512x64xbf16>, vector<16x64xf32> -> vector<16x64xf32>
    %c0_3 = arith.constant 0 : index
    %c0_4 = arith.constant 0 : index
    %3 = vector.load %arg3[%c0_3, %c0_4] : memref<1x64xf32, #tpu.memory_space<vmem>>, vector<1x64xf32>
    %4 = vector.broadcast %3 : vector<1x64xf32> to vector<16x64xf32>
    %5 = arith.addf %2, %4 : vector<16x64xf32>
    %cst_5 = arith.constant 0.000000e+00 : f32
    %6 = vector.broadcast %cst_5 : f32 to vector<16x64xf32>
    %7 = arith.maximumf %5, %6 : vector<16x64xf32>
    %8 = arith.truncf %7 : vector<16x64xf32> to vector<16x64xbf16>
    %c0_6 = arith.constant 0 : index
    %c0_7 = arith.constant 0 : index
    %9 = vector.load %arg4[%c0_6, %c0_7] : memref<16x64xbf16, #tpu.memory_space<vmem>>, vector<16x64xbf16>
    tpu.vector_store %arg4[%c0_6, %c0_7], %8 {strides = array<i32>} : memref<16x64xbf16, #tpu.memory_space<vmem>>, vector<16x64xbf16>,
    return
  }
  func.func @transform_0(%arg0: i32) -> (i32, i32) {
    %c0_i32 = arith.constant 0 : i32
    %c0_i32_0 = arith.constant 0 : i32
    return %arg0, %c0_i32 : i32, i32
  }
  func.func @transform_1(%arg0: i32) -> (i32, i32) {
    %c0_i32 = arith.constant 0 : i32
    %c0_i32_0 = arith.constant 0 : i32
    %c0_i32_1 = arith.constant 0 : i32
    return %c0_i32, %c0_i32_0 : i32, i32
  }
  func.func @transform_2(%arg0: i32) -> (i32, i32) {
    %c0_i32 = arith.constant 0 : i32
    %c0_i32_0 = arith.constant 0 : i32
    %c0_i32_1 = arith.constant 0 : i32
    return %c0_i32, %c0_i32_0 : i32, i32
  }
  func.func @transform_3(%arg0: i32) -> (i32, i32) {
    %c0_i32 = arith.constant 0 : i32
    %c0_i32_0 = arith.constant 0 : i32
    return %arg0, %c0_i32 : i32, i32
  }
}

module attributes {stable_mosaic.version = 11 : i64} {
  func.func @_matmul_bias_act_kernel(%arg0: i32, %arg1: memref<8x640xbf16, #tpu.memory_space<vmem>>, %arg2: memref<640x64xbf16, #tpu.memory_space<vmem>>, %arg3: memref<1x64xf32, #tpu.memory_space<vmem>>, %arg4: memref<8x64xbf16, #tpu.memory_space<vmem>>) attributes {dimension_semantics = [#tpu.dimension_semantics<parallel>], iteration_bounds = array<i64: 1>, scalar_prefetch = 0 : i64, scratch_operands = 0 : i64, tpu.core_type = #tpu.core_type<tc>, window_params = [{transform_indices = @transform_0, window_bounds = array<i64: 8, 640>}, {pipeline_mode = #tpu.pipeline_mode<synchronous>, transform_indices = @transform_1, window_bounds = array<i64: 640, 64>}, {pipeline_mode = #tpu.pipeline_mode<synchronous>, transform_indices = @transform_2, window_bounds = array<i64: 1, 64>}, {transform_indices = @transform_3, window_bounds = array<i64: 8, 64>}]} {
    %c0 = arith.constant 0 : index
    %c0_0 = arith.constant 0 : index
    %0 = vector.load %arg1[%c0, %c0_0] : memref<8x640xbf16, #tpu.memory_space<vmem>>, vector<8x640xbf16>
    %c0_1 = arith.constant 0 : index
    %c0_2 = arith.constant 0 : index
    %1 = vector.load %arg2[%c0_1, %c0_2] : memref<640x64xbf16, #tpu.memory_space<vmem>>, vector<640x64xbf16>
    %cst = arith.constant dense<0.000000e+00> : vector<8x64xf32>
    %2 = tpu.matmul %0, %1, %cst {dimension_numbers = #tpu.dot_dimension_numbers<[1], [0], [0], [1], [0, 0, 1, 1], [], []>} : vector<8x640xbf16>, vector<640x64xbf16>, vector<8x64xf32> -> vector<8x64xf32>
    %c0_3 = arith.constant 0 : index
    %c0_4 = arith.constant 0 : index
    %3 = vector.load %arg3[%c0_3, %c0_4] : memref<1x64xf32, #tpu.memory_space<vmem>>, vector<1x64xf32>
    %4 = vector.broadcast %3 : vector<1x64xf32> to vector<8x64xf32>
    %5 = arith.addf %2, %4 : vector<8x64xf32>
    %cst_5 = arith.constant 0.000000e+00 : f32
    %6 = vector.broadcast %cst_5 : f32 to vector<8x64xf32>
    %7 = arith.maximumf %5, %6 : vector<8x64xf32>
    %8 = arith.truncf %7 : vector<8x64xf32> to vector<8x64xbf16>
    %c0_6 = arith.constant 0 : index
    %c0_7 = arith.constant 0 : index
    %9 = vector.load %arg4[%c0_6, %c0_7] : memref<8x64xbf16, #tpu.memory_space<vmem>>, vector<8x64xbf16>
    tpu.vector_store %arg4[%c0_6, %c0_7], %8 {strides = array<i32>} : memref<8x64xbf16, #tpu.memory_space<vmem>>, vector<8x64xbf16>,
    return
  }
  func.func @transform_0(%arg0: i32) -> (i32, i32) {
    %c0_i32 = arith.constant 0 : i32
    %c0_i32_0 = arith.constant 0 : i32
    return %arg0, %c0_i32 : i32, i32
  }
  func.func @transform_1(%arg0: i32) -> (i32, i32) {
    %c0_i32 = arith.constant 0 : i32
    %c0_i32_0 = arith.constant 0 : i32
    %c0_i32_1 = arith.constant 0 : i32
    return %c0_i32, %c0_i32_0 : i32, i32
  }
  func.func @transform_2(%arg0: i32) -> (i32, i32) {
    %c0_i32 = arith.constant 0 : i32
    %c0_i32_0 = arith.constant 0 : i32
    %c0_i32_1 = arith.constant 0 : i32
    return %c0_i32, %c0_i32_0 : i32, i32
  }
  func.func @transform_3(%arg0: i32) -> (i32, i32) {
    %c0_i32 = arith.constant 0 : i32
    %c0_i32_0 = arith.constant 0 : i32
    return %arg0, %c0_i32 : i32, i32
  }
}

module attributes {stable_mosaic.version = 11 : i64} {
  func.func @_matmul_bias_act_kernel(%arg0: i32, %arg1: memref<2x256xbf16, #tpu.memory_space<vmem>>, %arg2: memref<256x32xbf16, #tpu.memory_space<vmem>>, %arg3: memref<1x32xf32, #tpu.memory_space<vmem>>, %arg4: memref<2x32xf32, #tpu.memory_space<vmem>>) attributes {dimension_semantics = [#tpu.dimension_semantics<parallel>], iteration_bounds = array<i64: 1>, scalar_prefetch = 0 : i64, scratch_operands = 0 : i64, tpu.core_type = #tpu.core_type<tc>, window_params = [{transform_indices = @transform_0, window_bounds = array<i64: 2, 256>}, {pipeline_mode = #tpu.pipeline_mode<synchronous>, transform_indices = @transform_1, window_bounds = array<i64: 256, 32>}, {pipeline_mode = #tpu.pipeline_mode<synchronous>, transform_indices = @transform_2, window_bounds = array<i64: 1, 32>}, {transform_indices = @transform_3, window_bounds = array<i64: 2, 32>}]} {
    %c0 = arith.constant 0 : index
    %c0_0 = arith.constant 0 : index
    %0 = vector.load %arg1[%c0, %c0_0] : memref<2x256xbf16, #tpu.memory_space<vmem>>, vector<2x256xbf16>
    %c0_1 = arith.constant 0 : index
    %c0_2 = arith.constant 0 : index
    %1 = vector.load %arg2[%c0_1, %c0_2] : memref<256x32xbf16, #tpu.memory_space<vmem>>, vector<256x32xbf16>
    %cst = arith.constant dense<0.000000e+00> : vector<2x32xf32>
    %2 = tpu.matmul %0, %1, %cst {dimension_numbers = #tpu.dot_dimension_numbers<[1], [0], [0], [1], [0, 0, 1, 1], [], []>} : vector<2x256xbf16>, vector<256x32xbf16>, vector<2x32xf32> -> vector<2x32xf32>
    %c0_3 = arith.constant 0 : index
    %c0_4 = arith.constant 0 : index
    %3 = vector.load %arg3[%c0_3, %c0_4] : memref<1x32xf32, #tpu.memory_space<vmem>>, vector<1x32xf32>
    %4 = vector.broadcast %3 : vector<1x32xf32> to vector<2x32xf32>
    %5 = arith.addf %2, %4 : vector<2x32xf32>
    %c0_5 = arith.constant 0 : index
    %c0_6 = arith.constant 0 : index
    %6 = vector.load %arg4[%c0_5, %c0_6] : memref<2x32xf32, #tpu.memory_space<vmem>>, vector<2x32xf32>
    tpu.vector_store %arg4[%c0_5, %c0_6], %5 {strides = array<i32>} : memref<2x32xf32, #tpu.memory_space<vmem>>, vector<2x32xf32>,
    return
  }
  func.func @transform_0(%arg0: i32) -> (i32, i32) {
    %c0_i32 = arith.constant 0 : i32
    %c0_i32_0 = arith.constant 0 : i32
    return %arg0, %c0_i32 : i32, i32
  }
  func.func @transform_1(%arg0: i32) -> (i32, i32) {
    %c0_i32 = arith.constant 0 : i32
    %c0_i32_0 = arith.constant 0 : i32
    %c0_i32_1 = arith.constant 0 : i32
    return %c0_i32, %c0_i32_0 : i32, i32
  }
  func.func @transform_2(%arg0: i32) -> (i32, i32) {
    %c0_i32 = arith.constant 0 : i32
    %c0_i32_0 = arith.constant 0 : i32
    %c0_i32_1 = arith.constant 0 : i32
    return %c0_i32, %c0_i32_0 : i32, i32
  }
  func.func @transform_3(%arg0: i32) -> (i32, i32) {
    %c0_i32 = arith.constant 0 : i32
    %c0_i32_0 = arith.constant 0 : i32
    return %arg0, %c0_i32 : i32, i32
  }
}

</mosaic_0001>

<llo_original>
// kernel: tpu_custom_call.1
$region0: #{tpu_custom_call.1}
  #allocation0 [shape = 'u32[]', space=smem, size = 0x4, offset = 0x4, fixed_abs, tag = 'smem constant byte address 0x4 - core index']
  #allocation1 [shape = 'u32[144,128]{1,0:T(1,128)}', space=vmem, size = 0x12000, scoped, tag = 'internal scratch']
  %s0 = inlined_call_operand.hbm [shape: f32[8,128], index: 0, kind: input, shape index: {}]
  %s1 = inlined_call_operand.hbm [shape: f32[8,128], index: 1, kind: output, shape index: {}]
  %s2 = sld [smem:[#allocation0]]
  $region41: #{tpu_custom_call.1} parent=0
    _
  %s4 = ssub.s32 1, %s2
  %s5 = scalar_select 0, %s4, %s2
  $region1: #{tpu_custom_call.1} parent=0
    #allocation2 [shape = 'u8[4096]{0}', space=vmem, size = 0x1000, scoped, tag = 'input window, operand 0, single buffered']
    #allocation3 [shape = 's32[2]{0}', space=sflag, size = 0x8, scoped, tag = 'scoped memory for tpu_custom_call.1']
    #allocation4 [shape = 's32[2]{0}', space=sflag, size = 0x8, scoped, tag = 'scoped memory for tpu_custom_call.1']
    #allocation5 [shape = 'u8[4096]{0}', space=vmem, size = 0x1000, scoped, tag = 'output window, operand 0, single buffered']
    %6 = vsyncpa [#allocation3], 0
    %7 = vsyncpa [#allocation4], 0
    loop: start=0, step=1, limit=4
    $region2: #{tpu_custom_call.1} parent=1 // loop_pre_header
      _
    $region3: #{tpu_custom_call.1} parent=1 // loop_header
      %s9 = sphi 0, %s13
      %p10 = scmp.ge.s32.totalorder %s9, 4
      %s17 = sphi 0, %s17
      %s19 = sphi 0, %s17
      %s20 = sphi 0, %s19
      %s34 = sphi 0, %s20
      %s38 = sphi 0, %s38
      %s40 = sphi 0, %s38
      %s41 = sphi 0, %s40
      %s55 = sphi 0, %s41
    $region4: #{tpu_custom_call.1} parent=1 // loop_header_branch
      %12 = sbr.rel (%p10) target = $region8
    $region5: #{tpu_custom_call.1} parent=1 // loop_body
      %s14 = ssub.s32 %s9, 1
      %s15 = ssub.s32 %s9, 2
      %s16 = sadd.s32 %s9, 1
      %s18 = sadd.s32 %s17, 1
      %p21 = scmp.eq.s32.totalorder %s9, 1
      %p22 = scmp.ne.s32.totalorder %s17, %s19
      %p23 = scmp.eq.s32.totalorder %s9, 0
      %p24 = por %p22, %p23
      %p25 = scmp.ne.s32.totalorder %s17, %s19
      %p26 = scmp.eq.s32.totalorder %s14, 1
      %p27 = por %p25, %p26
      %p28 = scmp.ne.s32.totalorder %s19, %s20
      %p29 = scmp.eq.s32.totalorder %s14, 0
      %p30 = por %p28, %p29
      %p31 = scmp.ne.s32.totalorder %s19, %s20
      %p32 = scmp.eq.s32.totalorder %s15, 1
      %p33 = por %p31, %p32
      %p35 = scmp.ne.s32.totalorder %s20, %s34
      %p36 = scmp.eq.s32.totalorder %s15, 0
      %p37 = por %p35, %p36
      %s39 = sadd.s32 %s38, 1
      %p42 = scmp.eq.s32.totalorder %s9, 1
      %p43 = scmp.ne.s32.totalorder %s38, %s40
      %p44 = scmp.eq.s32.totalorder %s9, 0
      %p45 = por %p43, %p44
      %p46 = scmp.ne.s32.totalorder %s38, %s40
      %p47 = scmp.eq.s32.totalorder %s14, 1
      %p48 = por %p46, %p47
      %p49 = scmp.ne.s32.totalorder %s40, %s41
      %p50 = scmp.eq.s32.totalorder %s14, 0
      %p51 = por %p49, %p50
      %p52 = scmp.ne.s32.totalorder %s40, %s41
      %p53 = scmp.eq.s32.totalorder %s15, 1
      %p54 = por %p52, %p53
      %p56 = scmp.ne.s32.totalorder %s41, %s55
      %p57 = scmp.eq.s32.totalorder %s15, 0
      %p58 = por %p56, %p57
      %p59 = scmp.le.s32.totalorder 1, %s9
      %p60 = scmp.lt.s32.totalorder %s9, 3
      %p61 = pnand %p59, %p60
      %p62 = pneg %p61
      // Predicated region
      $region9: #{tpu_custom_call.1} parent=5 // pred_check
        _
      $region10: #{tpu_custom_call.1} parent=5 // pred_check_branch
        %64 = sbr.rel (%p61) target = $region12
      $region11: #{tpu_custom_call.1} parent=5 // pred_region
        %s65 = ssub.s32 %s9, 1
        // Predicated region
        $region13: #{tpu_custom_call.1} parent=11 // pred_check
          %p66 = pneg %p30
        $region14: #{tpu_custom_call.1} parent=11 // pred_check_branch
          %68 = sbr.rel (%p66) target = $region16
        $region15: #{tpu_custom_call.1} parent=11 // pred_region
          %s70 = ssub.s32 128, 128
          %71 = vsyncadd [#allocation3], %s70
          %s73 = sshll.u32 [#allocation2], 4
          %s74 = int_to_ptr.vmem [resolvable:$true] %s73
          %76 = dma.hbm_to_vmem [thread:$0]  %s0, 128, %s74, [#allocation3]
        $region16: #{tpu_custom_call.1} parent=11 // pred_fallthru
          _
      $region12: #{tpu_custom_call.1} parent=5 // pred_fallthru
        _
      %p77 = scmp.lt.s32.totalorder %s9, 2
      // Predicated region
      $region17: #{tpu_custom_call.1} parent=5 // pred_check
        %p78 = pneg %p77
      $region18: #{tpu_custom_call.1} parent=5 // pred_check_branch
        %80 = sbr.rel (%p78) target = $region20
      $region19: #{tpu_custom_call.1} parent=5 // pred_region
        _
      $region20: #{tpu_custom_call.1} parent=5 // pred_fallthru
        _
      %p81 = scmp.le.s32.totalorder 1, %s9
      %p82 = scmp.lt.s32.totalorder %s9, 3
      %p83 = pnand %p81, %p82
      %p84 = pneg %p83
      // Predicated region
      $region21: #{tpu_custom_call.1} parent=5 // pred_check
        _
      $region22: #{tpu_custom_call.1} parent=5 // pred_check_branch
        %86 = sbr.rel (%p83) target = $region24
      $region23: #{tpu_custom_call.1} parent=5 // pred_region
        %s87 = ssub.s32 %s9, 1
        // Predicated region
        $region25: #{tpu_custom_call.1} parent=23 // pred_check
          %p88 = pneg %p30
        $region26: #{tpu_custom_call.1} parent=23 // pred_check_branch
          %90 = sbr.rel (%p88) target = $region28
        $region27: #{tpu_custom_call.1} parent=23 // pred_region
          %91 = dma.done [#allocation3], 128
        $region28: #{tpu_custom_call.1} parent=23 // pred_fallthru
          _
        %p92 = pneg %p30
        %p93 = pneg %p27
        %p94 = pneg %p51
        %p95 = pneg %p48
        %v96 = vld [vmem:[#allocation2] sm:$0xff]
        %v97 = vadd.f32 %v96, 1.0
        %98 = vst [vmem:[#allocation5] sm:$0xff] %v97
        // Predicated region
        $region29: #{tpu_custom_call.1} parent=23 // pred_check
          %p99 = pneg %p48
        $region30: #{tpu_custom_call.1} parent=23 // pred_check_branch
          %101 = sbr.rel (%p99) target = $region32
        $region31: #{tpu_custom_call.1} parent=23 // pred_region
          %s103 = ssub.s32 128, 128
          %104 = vsyncadd [#allocation4], %s103
          %s106 = sshll.u32 [#allocation5], 4
          %s107 = int_to_ptr.vmem [resolvable:$true] %s106
          %109 = dma.vmem_to_hbm [thread:$0]  %s107, 128, %s1, [#allocation4]
        $region32: #{tpu_custom_call.1} parent=23 // pred_fallthru
          _
        // Predicated region
        $region33: #{tpu_custom_call.1} parent=23 // pred_check
          %p110 = pneg %p48
        $region34: #{tpu_custom_call.1} parent=23 // pred_check_branch
          %112 = sbr.rel (%p110) target = $region36
        $region35: #{tpu_custom_call.1} parent=23 // pred_region
          %113 = dma.done [#allocation4], 128
        $region36: #{tpu_custom_call.1} parent=23 // pred_fallthru
          _
      $region24: #{tpu_custom_call.1} parent=5 // pred_fallthru
        _
      %p114 = scmp.le.s32.totalorder 2, %s9
      // Predicated region
      $region37: #{tpu_custom_call.1} parent=5 // pred_check
        %p115 = pneg %p114
      $region38: #{tpu_custom_call.1} parent=5 // pred_check_branch
        %117 = sbr.rel (%p115) target = $region40
      $region39: #{tpu_custom_call.1} parent=5 // pred_region
        %s118 = ssub.s32 %s9, 2
      $region40: #{tpu_custom_call.1} parent=5 // pred_fallthru
        _
    $region6: #{tpu_custom_call.1} parent=1 // loop_footer
      %s13 = sadd.s32 1, %s9
    $region7: #{tpu_custom_call.1} parent=1 // loop_footer_branch
      %8 = sbr.rel target = $region3
    $region8: #{tpu_custom_call.1} parent=1 // loop_exit
      _
    %119 = vsyncpa [#allocation3], 1
    %s120 = scalar_lea.sflag [#allocation3], 1
    %121 = vsyncpa %s120, 1
    %122 = vsyncpa [#allocation4], 1
    %s123 = scalar_lea.sflag [#allocation4], 1
    %124 = vsyncpa %s123, 1

// kernel: _lambda_.4
$region0: #{_lambda_.4}
  #allocation0 [shape = 'u32[]', space=smem, size = 0x4, offset = 0x4, fixed_abs, tag = 'smem constant byte address 0x4 - core index']
  #allocation1 [shape = 'u32[144,128]{1,0:T(1,128)}', space=vmem, size = 0x12000, scoped, tag = 'internal scratch']
  %s0 = inlined_call_operand.vmem [shape: bf16[200,256], index: 0, kind: input, shape index: {}]
  %s1 = inlined_call_operand.vmem [shape: bf16[256,32], index: 1, kind: input, shape index: {}]
  %s2 = inlined_call_operand.vmem [shape: f32[1,32], index: 2, kind: input, shape index: {}]
  %s3 = inlined_call_operand.vmem [shape: bf16[200,32], index: 3, kind: output, shape index: {}]
  %s4 = sld [smem:[#allocation0]]
  $region89: #{_lambda_.4} parent=0
    _
  %s6 = ssub.s32 1, %s4
  %s7 = scalar_select 0, %s6, %s4
  $region1: #{_lambda_.4} parent=0
    #allocation2 [shape = 'u8[53248]{0}', space=vmem, size = 0xd000, scoped, tag = 'output window, operand 0']
    loop: start=0, step=1, limit=4
    $region2: #{_lambda_.4} parent=1 // loop_pre_header
      _
    $region3: #{_lambda_.4} parent=1 // loop_header
      %s9 = sphi 0, %s13
      %p10 = scmp.ge.s32.totalorder %s9, 4
      %s19 = sphi 0, %s21
      %s22 = sphi 0, %s19
      %s23 = sphi 0, %s22
      %s39 = sphi 0, %s23
      %s43 = sphi 0, %s43
      %s45 = sphi 0, %s43
      %s46 = sphi 0, %s45
      %s60 = sphi 0, %s46
      %s64 = sphi 0, %s64
      %s66 = sphi 0, %s64
      %s67 = sphi 0, %s66
      %s81 = sphi 0, %s67
      %s87 = sphi 0, %s89
      %s90 = sphi 0, %s87
      %s91 = sphi 0, %s90
      %s107 = sphi 0, %s91
    $region4: #{_lambda_.4} parent=1 // loop_header_branch
      %12 = sbr.rel (%p10) target = $region8
    $region5: #{_lambda_.4} parent=1 // loop_body
      %s14 = ssub.s32 %s9, 1
      %s15 = ssub.s32 %s9, 2
      %s16 = sadd.s32 %s9, 1
      %s17 = ssub.s32 %s9, %s16
      %p18 = scmp.eq.s32.totalorder %s17, 0
      %s20 = sadd.s32 %s19, 1
      %s21 = scalar_select %p18, %s19, %s20
      %p24 = pneg %p18
      %p25 = scmp.eq.s32.totalorder %s9, 1
      %p26 = por %p24, %p25
      %p27 = scmp.ne.s32.totalorder %s19, %s22
      %p28 = scmp.eq.s32.totalorder %s9, 0
      %p29 = por %p27, %p28
      %p30 = scmp.ne.s32.totalorder %s19, %s22
      %p31 = scmp.eq.s32.totalorder %s14, 1
      %p32 = por %p30, %p31
      %p33 = scmp.ne.s32.totalorder %s22, %s23
      %p34 = scmp.eq.s32.totalorder %s14, 0
      %p35 = por %p33, %p34
      %p36 = scmp.ne.s32.totalorder %s22, %s23
      %p37 = scmp.eq.s32.totalorder %s15, 1
      %p38 = por %p36, %p37
      %p40 = scmp.ne.s32.totalorder %s23, %s39
      %p41 = scmp.eq.s32.totalorder %s15, 0
      %p42 = por %p40, %p41
      %s44 = sadd.s32 %s43, 1
      %p47 = scmp.eq.s32.totalorder %s9, 1
      %p48 = scmp.ne.s32.totalorder %s43, %s45
      %p49 = scmp.eq.s32.totalorder %s9, 0
      %p50 = por %p48, %p49
      %p51 = scmp.ne.s32.totalorder %s43, %s45
      %p52 = scmp.eq.s32.totalorder %s14, 1
      %p53 = por %p51, %p52
      %p54 = scmp.ne.s32.totalorder %s45, %s46
      %p55 = scmp.eq.s32.totalorder %s14, 0
      %p56 = por %p54, %p55
      %p57 = scmp.ne.s32.totalorder %s45, %s46
      %p58 = scmp.eq.s32.totalorder %s15, 1
      %p59 = por %p57, %p58
      %p61 = scmp.ne.s32.totalorder %s46, %s60
      %p62 = scmp.eq.s32.totalorder %s15, 0
      %p63 = por %p61, %p62
      %s65 = sadd.s32 %s64, 1
      %p68 = scmp.eq.s32.totalorder %s9, 1
      %p69 = scmp.ne.s32.totalorder %s64, %s66
      %p70 = scmp.eq.s32.totalorder %s9, 0
      %p71 = por %p69, %p70
      %p72 = scmp.ne.s32.totalorder %s64, %s66
      %p73 = scmp.eq.s32.totalorder %s14, 1
      %p74 = por %p72, %p73
      %p75 = scmp.ne.s32.totalorder %s66, %s67
      %p76 = scmp.eq.s32.totalorder %s14, 0
      %p77 = por %p75, %p76
      %p78 = scmp.ne.s32.totalorder %s66, %s67
      %p79 = scmp.eq.s32.totalorder %s15, 1
      %p80 = por %p78, %p79
      %p82 = scmp.ne.s32.totalorder %s67, %s81
      %p83 = scmp.eq.s32.totalorder %s15, 0
      %p84 = por %p82, %p83
      %s85 = ssub.s32 %s9, %s16
      %p86 = scmp.eq.s32.totalorder %s85, 0
      %s88 = sadd.s32 %s87, 1
      %s89 = scalar_select %p86, %s87, %s88
      %p92 = pneg %p86
      %p93 = scmp.eq.s32.totalorder %s9, 1
      %p94 = por %p92, %p93
      %p95 = scmp.ne.s32.totalorder %s87, %s90
      %p96 = scmp.eq.s32.totalorder %s9, 0
      %p97 = por %p95, %p96
      %p98 = scmp.ne.s32.totalorder %s87, %s90
      %p99 = scmp.eq.s32.totalorder %s14, 1
      %p100 = por %p98, %p99
      %p101 = scmp.ne.s32.totalorder %s90, %s91
      %p102 = scmp.eq.s32.totalorder %s14, 0
      %p103 = por %p101, %p102
      %p104 = scmp.ne.s32.totalorder %s90, %s91
      %p105 = scmp.eq.s32.totalorder %s15, 1
      %p106 = por %p104, %p105
      %p108 = scmp.ne.s32.totalorder %s91, %s107
      %p109 = scmp.eq.s32.totalorder %s15, 0
      %p110 = por %p108, %p109
      %p111 = scmp.le.s32.totalorder 1, %s9
      %p112 = scmp.lt.s32.totalorder %s9, 3
      %p113 = pnand %p111, %p112
      %p114 = pneg %p113
      // Predicated region
      $region9: #{_lambda_.4} parent=5 // pred_check
        _
      $region10: #{_lambda_.4} parent=5 // pred_check_branch
        %116 = sbr.rel (%p113) target = $region12
      $region11: #{_lambda_.4} parent=5 // pred_region
        %s117 = ssub.s32 %s9, 1
        // Predicated region
        $region13: #{_lambda_.4} parent=11 // pred_check
          %p118 = pneg %p56
        $region14: #{_lambda_.4} parent=11 // pred_check_branch
          %120 = sbr.rel (%p118) target = $region16
        $region15: #{_lambda_.4} parent=11 // pred_region
          _
        $region16: #{_lambda_.4} parent=11 // pred_fallthru
          _
        // Predicated region
        $region17: #{_lambda_.4} parent=11 // pred_check
          %p121 = pneg %p77
        $region18: #{_lambda_.4} parent=11 // pred_check_branch
          %123 = sbr.rel (%p121) target = $region20
        $region19: #{_lambda_.4} parent=11 // pred_region
          _
        $region20: #{_lambda_.4} parent=11 // pred_fallthru
          _
      $region12: #{_lambda_.4} parent=5 // pred_fallthru
        _
      %p124 = scmp.lt.s32.totalorder %s9, 2
      // Predicated region
      $region21: #{_lambda_.4} parent=5 // pred_check
        %p125 = pneg %p124
      $region22: #{_lambda_.4} parent=5 // pred_check_branch
        %127 = sbr.rel (%p125) target = $region24
      $region23: #{_lambda_.4} parent=5 // pred_region
        // Predicated region
        $region25: #{_lambda_.4} parent=23 // pred_check
          %p128 = pneg %p29
        $region26: #{_lambda_.4} parent=23 // pred_check_branch
          %130 = sbr.rel (%p128) target = $region28
        $region27: #{_lambda_.4} parent=23 // pred_region
          %s131 = smul.u32 13, %s9
          %s132 = ssub.s32 25, %s131
          %p133 = scmp.lt.s32.totalorder %s132, 13
          %s134 = scalar_select %p133, %s132, 13
          %s135 = smul.u32 64, %s134
          %s136 = smul.u32 %s135, 2
          %p137 = scmp.lt.s32.totalorder %s131, 24
          %s138 = scalar_select %p137, %s131, 24
          %s139 = smul.addr %s138, 2
          %s140 = smul.addr %s139, 4
          %s141 = scalar_lea.vmem %s0, %s140
          %s142 = smul.u32 13, %s9
          %s143 = ssub.s32 25, %s142
          %p144 = scmp.lt.s32.totalorder %s143, 13
          %s145 = scalar_select %p144, %s143, 13
          %s146 = smul.u32 64, %s145
          %s147 = smul.u32 %s146, 2
        $region28: #{_lambda_.4} parent=23 // pred_fallthru
          _
      $region24: #{_lambda_.4} parent=5 // pred_fallthru
        _
      %p148 = scmp.le.s32.totalorder 1, %s9
      %p149 = scmp.lt.s32.totalorder %s9, 3
      %p150 = pnand %p148, %p149
      %p151 = pneg %p150
      // Predicated region
      $region29: #{_lambda_.4} parent=5 // pred_check
        _
      $region30: #{_lambda_.4} parent=5 // pred_check_branch
        %153 = sbr.rel (%p150) target = $region32
      $region31: #{_lambda_.4} parent=5 // pred_region
        %s154 = ssub.s32 %s9, 1
        %s155 = smul.u32 13, %s14
        %s156 = ssub.s32 25, %s155
        %p157 = scmp.lt.s32.totalorder %s156, 13
        %s158 = scalar_select %p157, %s156, 13
        %s159 = smul.u32 64, %s158
        %s160 = smul.u32 %s159, 2
        %p161 = scmp.lt.s32.totalorder %s155, 24
        %s162 = scalar_select %p161, %s155, 24
        %s163 = smul.addr %s162, 2
        %s164 = smul.addr %s163, 4
        %s165 = scalar_lea.vmem %s0, %s164
        %p166 = pneg %p35
        %p167 = pneg %p32
        %p168 = pneg %p56
        %p169 = pneg %p53
        %p170 = pneg %p77
        %p171 = pneg %p74
        %p172 = pneg %p103
        %p173 = pneg %p100
        %s174 = sand.u32 %s90, 1
        %s175 = sand.u32 %s90, 1
        %s176 = smul.addr %s175, 52
        %s177 = scalar_lea.vmem [#allocation2], %s176
        %s178 = smul.u32 13, %s14
        %s179 = ssub.s32 25, %s178
        %p180 = scmp.lt.s32.totalorder %s179, 13
        %s181 = scalar_select %p180, %s179, 13
        %s182 = smul.u32 64, %s181
        %s183 = smul.u32 %s182, 2
        %p184 = scmp.lt.s32.totalorder %s178, 24
        %s185 = scalar_select %p184, %s178, 24
        %s186 = smul.addr %s185, 2
        %s187 = smul.addr %s186, 4
        %s188 = scalar_lea.vmem %s0, %s187
        %s189 = smul.u32 13, %s14
        %s190 = ssub.s32 25, %s189
        %p191 = scmp.lt.s32.totalorder %s190, 13
        %s192 = scalar_select %p191, %s190, 13
        %s193 = smul.u32 64, %s192
        %s194 = smul.u32 %s193, 2
        %s195 = smul.u32 13, %s14
        %s196 = ssub.s32 25, %s195
        %p197 = scmp.lt.s32.totalorder %s196, 13
        %s198 = scalar_select %p197, %s196, 13
        %s199 = smul.u32 64, %s198
        %v201 = vld [vmem:[%s188] sm:$0xff]
        %v202 = vld [vmem:[%s188 + $0x8] sm:$0xff]
        %v203 = vld [vmem:[%s188 + $0x10] sm:$0xff]
        %v204 = vld [vmem:[%s188 + $0x18] sm:$0xff]
        %v205 = vld [vmem:[%s188 + $0x20] sm:$0xff]
        %v206 = vld [vmem:[%s188 + $0x28] sm:$0xff]
        %v207 = vld [vmem:[%s188 + $0x30] sm:$0xff]
        %v208 = vld [vmem:[%s188 + $0x38] sm:$0xff]
        %v209 = vld [vmem:[%s188 + $0x40] sm:$0xff]
        %v210 = vld [vmem:[%s188 + $0x48] sm:$0xff]
        %v211 = vld [vmem:[%s188 + $0x50] sm:$0xff]
        %v212 = vld [vmem:[%s188 + $0x58] sm:$0xff]
        %v213 = vld [vmem:[%s188 + $0x60] sm:$0xff]
        %v214 = vld [vmem:[%s1] sm:$0xf]
        %v215 = vld [vmem:[%s1 + $0x4] sm:$0xf]
        %v216 = vld [vmem:[%s1 + $0x8] sm:$0xf]
        %v217 = vld [vmem:[%s1 + $0xc] sm:$0xf]
        %v218 = vld [vmem:[%s1 + $0x10] sm:$0xf]
        %v219 = vld [vmem:[%s1 + $0x14] sm:$0xf]
        %v220 = vld [vmem:[%s1 + $0x18] sm:$0xf]
        %v221 = vld [vmem:[%s1 + $0x1c] sm:$0xf]
        %v222 = vld [vmem:[%s1 + $0x20] sm:$0xf]
        %v223 = vld [vmem:[%s1 + $0x24] sm:$0xf]
        %v224 = vld [vmem:[%s1 + $0x28] sm:$0xf]
        %v225 = vld [vmem:[%s1 + $0x2c] sm:$0xf]
        %v226 = vld [vmem:[%s1 + $0x30] sm:$0xf]
        %v227 = vld [vmem:[%s1 + $0x34] sm:$0xf]
        %v228 = vld [vmem:[%s1 + $0x38] sm:$0xf]
        %v229 = vld [vmem:[%s1 + $0x3c] sm:$0xf]
        %v230 = vld [vmem:[%s1 + $0x40] sm:$0xf]
        %v231 = vld [vmem:[%s1 + $0x44] sm:$0xf]
        %v232 = vld [vmem:[%s1 + $0x48] sm:$0xf]
        %v233 = vld [vmem:[%s1 + $0x4c] sm:$0xf]
        %v234 = vld [vmem:[%s1 + $0x50] sm:$0xf]
        %v235 = vld [vmem:[%s1 + $0x54] sm:$0xf]
        %v236 = vld [vmem:[%s1 + $0x58] sm:$0xf]
        %v237 = vld [vmem:[%s1 + $0x5c] sm:$0xf]
        %v238 = vld [vmem:[%s1 + $0x60] sm:$0xf]
        %v239 = vld [vmem:[%s1 + $0x64] sm:$0xf]
        %v240 = vld [vmem:[%s1 + $0x68] sm:$0xf]
        %v241 = vld [vmem:[%s1 + $0x6c] sm:$0xf]
        %v242 = vld [vmem:[%s1 + $0x70] sm:$0xf]
        %v243 = vld [vmem:[%s1 + $0x74] sm:$0xf]
        %v244 = vld [vmem:[%s1 + $0x78] sm:$0xf]
        %v245 = vld [vmem:[%s1 + $0x7c] sm:$0xf]
        %v246 = vld [vmem:[%s2] sm:$0x1]
        %v248 = vlaneseq
        %v249 = vshrl.u32 %v248, 7
        %v250 = vsub.s32 0, %v249
        %v251 = vrot.slane %v246, %v250
        %v266 = vunpack.c.l.b16 %v201
        %v267 = vunpack.c.h.b16 %v201
        %v268 = vunpack.c.l.b16 %v202
        %v269 = vunpack.c.h.b16 %v202
        %v270 = vunpack.c.l.b16 %v203
        %v271 = vunpack.c.h.b16 %v203
        %v272 = vunpack.c.l.b16 %v204
        %v273 = vunpack.c.h.b16 %v204
        %v274 = vunpack.c.l.b16 %v205
        %v275 = vunpack.c.h.b16 %v205
        %v276 = vunpack.c.l.b16 %v206
        %v277 = vunpack.c.h.b16 %v206
        %v278 = vunpack.c.l.b16 %v207
        %v279 = vunpack.c.h.b16 %v207
        %v280 = vunpack.c.l.b16 %v208
        %v281 = vunpack.c.h.b16 %v208
        %v282 = vunpack.c.l.b16 %v209
        %v283 = vunpack.c.h.b16 %v209
        %v284 = vunpack.c.l.b16 %v210
        %v285 = vunpack.c.h.b16 %v210
        %v286 = vunpack.c.l.b16 %v211
        %v287 = vunpack.c.h.b16 %v211
        %v288 = vunpack.c.l.b16 %v212
        %v289 = vunpack.c.h.b16 %v212
        %v290 = vunpack.c.l.b16 %v213
        %v291 = vunpack.c.h.b16 %v213
        %v292 = vpack.c.b16 %v268, %v266
        %v293 = vpack.c.b16 %v269, %v267
        %v294 = vpack.c.b16 %v272, %v270
        %v295 = vpack.c.b16 %v273, %v271
        %v296 = vpack.c.b16 %v276, %v274
        %v297 = vpack.c.b16 %v277, %v275
        %v298 = vpack.c.b16 %v280, %v278
        %v299 = vpack.c.b16 %v281, %v279
        %v300 = vpack.c.b16 %v284, %v282
        %v301 = vpack.c.b16 %v285, %v283
        %v302 = vpack.c.b16 %v288, %v286
        %v303 = vpack.c.b16 %v289, %v287
        %v304 = vpack.c.b16 %v290, %v290
        %v305 = vpack.c.b16 %v291, %v291
        %v352 = vunpack.c.l.b16 %v214
        %v353 = vunpack.c.l.b16 %v215
        %v354 = vunpack.c.l.b16 %v216
        %v355 = vunpack.c.l.b16 %v217
        %v356 = vunpack.c.l.b16 %v218
        %v357 = vunpack.c.l.b16 %v219
        %v358 = vunpack.c.l.b16 %v220
        %v359 = vunpack.c.l.b16 %v221
        %v360 = vunpack.c.l.b16 %v222
        %v361 = vunpack.c.l.b16 %v223
        %v362 = vunpack.c.l.b16 %v224
        %v363 = vunpack.c.l.b16 %v225
        %v364 = vunpack.c.l.b16 %v226
        %v365 = vunpack.c.l.b16 %v227
        %v366 = vunpack.c.l.b16 %v228
        %v367 = vunpack.c.l.b16 %v229
        %v368 = vunpack.c.l.b16 %v230
        %v369 = vunpack.c.l.b16 %v231
        %v370 = vunpack.c.l.b16 %v232
        %v371 = vunpack.c.l.b16 %v233
        %v372 = vunpack.c.l.b16 %v234
        %v373 = vunpack.c.l.b16 %v235
        %v374 = vunpack.c.l.b16 %v236
        %v375 = vunpack.c.l.b16 %v237
        %v376 = vunpack.c.l.b16 %v238
        %v377 = vunpack.c.l.b16 %v239
        %v378 = vunpack.c.l.b16 %v240
        %v379 = vunpack.c.l.b16 %v241
        %v380 = vunpack.c.l.b16 %v242
        %v381 = vunpack.c.l.b16 %v243
        %v382 = vunpack.c.l.b16 %v244
        %v383 = vunpack.c.l.b16 %v245
        %v384 = vpack.c.b16 %v353, %v352
        %v385 = vpack.c.b16 %v355, %v354
        %v386 = vpack.c.b16 %v357, %v356
        %v387 = vpack.c.b16 %v359, %v358
        %v388 = vpack.c.b16 %v361, %v360
        %v389 = vpack.c.b16 %v363, %v362
        %v390 = vpack.c.b16 %v365, %v364
        %v391 = vpack.c.b16 %v367, %v366
        %v392 = vpack.c.b16 %v369, %v368
        %v393 = vpack.c.b16 %v371, %v370
        %v394 = vpack.c.b16 %v373, %v372
        %v395 = vpack.c.b16 %v375, %v374
        %v396 = vpack.c.b16 %v377, %v376
        %v397 = vpack.c.b16 %v379, %v378
        %v398 = vpack.c.b16 %v381, %v380
        %v399 = vpack.c.b16 %v383, %v382
        %416 = vmatprep.subr.bf16.mxu0 0
        %417 = vmatpush1.bf16.msra.mxu0 %v384
        %418 = vmatprep.subr.bf16.mxu0 0
        %419 = vmatpush1.bf16.msra.mxu0 %v385
        %420 = vmatprep.subr.bf16.mxu0 0
        %421 = vmatpush1.bf16.msra.mxu0 %v386
        %422 = vmatprep.subr.bf16.mxu0 0
        %423 = vmatpush1.bf16.msra.mxu0 %v387
        %424 = vmatprep.subr.bf16.mxu0 0
        %425 = vmatpush1.bf16.msra.mxu0 %v388
        %426 = vmatprep.subr.bf16.mxu0 0
        %427 = vmatpush1.bf16.msra.mxu0 %v389
        %428 = vmatprep.subr.bf16.mxu0 0
        %429 = vmatpush1.bf16.msra.mxu0 %v390
        %430 = vmatprep.subr.bf16.mxu0 0
        %431 = vmatpush1.bf16.msra.mxu0 %v391
        %432 = vmatprep.subr.bf16.mxu0 0
        %433 = vmatpush1.bf16.msra.mxu0 %v392
        %434 = vmatprep.subr.bf16.mxu0 0
        %435 = vmatpush1.bf16.msra.mxu0 %v393
        %436 = vmatprep.subr.bf16.mxu0 0
        %437 = vmatpush1.bf16.msra.mxu0 %v394
        %438 = vmatprep.subr.bf16.mxu0 0
        %439 = vmatpush1.bf16.msra.mxu0 %v395
        %440 = vmatprep.subr.bf16.mxu0 0
        %441 = vmatpush1.bf16.msra.mxu0 %v396
        %442 = vmatprep.subr.bf16.mxu0 0
        %443 = vmatpush1.bf16.msra.mxu0 %v397
        %444 = vmatprep.subr.bf16.mxu0 0
        %445 = vmatpush1.bf16.msra.mxu0 %v398
        %446 = vmatprep.subr.bf16.mxu0 0
        %447 = vmatpush1.bf16.msra.mxu0 %v399
        %448 = vmatprep.mubr.bf16.mxu0 %v293
        %449 = vmatmul.mubr.bf16.gmra.mrb[0].mxu0 %v292
        %v450 = vpop.f32.mrb[0].mxu0
        %v451 = vadd.f32 %v251, %v450
        %v452 = vpop.f32.mrb[0].mxu0
        %v453 = vpop.f32.mrb[0].mxu0
        %v454 = vadd.f32 %v251, %v453
        %v455 = vpop.f32.mrb[0].mxu0
        %456 = vmatprep.mubr.bf16.mxu0 %v295
        %457 = vmatmul.mubr.bf16.gmra.mrb[0].mxu0 %v294
        %v458 = vpop.f32.mrb[0].mxu0
        %v459 = vadd.f32 %v251, %v458
        %v460 = vpop.f32.mrb[0].mxu0
        %v461 = vpop.f32.mrb[0].mxu0
        %v462 = vadd.f32 %v251, %v461
        %v463 = vpop.f32.mrb[0].mxu0
        %464 = vmatprep.mubr.bf16.mxu0 %v297
        %465 = vmatmul.mubr.bf16.gmra.mrb[0].mxu0 %v296
        %v466 = vpop.f32.mrb[0].mxu0
        %v467 = vadd.f32 %v251, %v466
        %v468 = vpop.f32.mrb[0].mxu0
        %v469 = vpop.f32.mrb[0].mxu0
        %v470 = vadd.f32 %v251, %v469
        %v471 = vpop.f32.mrb[0].mxu0
        %472 = vmatprep.mubr.bf16.mxu0 %v299
        %473 = vmatmul.mubr.bf16.gmra.mrb[0].mxu0 %v298
        %v474 = vpop.f32.mrb[0].mxu0
        %v475 = vadd.f32 %v251, %v474
        %v476 = vpop.f32.mrb[0].mxu0
        %v477 = vpop.f32.mrb[0].mxu0
        %v478 = vadd.f32 %v251, %v477
        %v479 = vpop.f32.mrb[0].mxu0
        %480 = vmatprep.mubr.bf16.mxu0 %v301
        %481 = vmatmul.mubr.bf16.gmra.mrb[0].mxu0 %v300
        %v482 = vpop.f32.mrb[0].mxu0
        %v483 = vadd.f32 %v251, %v482
        %v484 = vpop.f32.mrb[0].mxu0
        %v485 = vpop.f32.mrb[0].mxu0
        %v486 = vadd.f32 %v251, %v485
        %v487 = vpop.f32.mrb[0].mxu0
        %488 = vmatprep.mubr.bf16.mxu0 %v303
        %489 = vmatmul.mubr.bf16.gmra.mrb[0].mxu0 %v302
        %v490 = vpop.f32.mrb[0].mxu0
        %v491 = vadd.f32 %v251, %v490
        %v492 = vpop.f32.mrb[0].mxu0
        %v493 = vpop.f32.mrb[0].mxu0
        %v494 = vadd.f32 %v251, %v493
        %v495 = vpop.f32.mrb[0].mxu0
        %496 = vmatprep.mubr.bf16.mxu0 %v305
        %497 = vmatmul.mubr.bf16.gmra.mrb[0].mxu0 %v304
        %v498 = vpop.f32.mrb[0].mxu0
        %v499 = vadd.f32 %v251, %v498
        %v500 = vpop.f32.mrb[0].mxu0
        %v501 = vpop.f32.mrb[0].mxu0
        %v502 = vpop.f32.mrb[0].mxu0
        %503 = vdwg.mxu0
        %v504 = vmax.f32 %v451, 0.0
        %v505 = vmax.f32 %v454, 0.0
        %v506 = vmax.f32 %v459, 0.0
        %v507 = vmax.f32 %v462, 0.0
        %v508 = vmax.f32 %v467, 0.0
        %v509 = vmax.f32 %v470, 0.0
        %v510 = vmax.f32 %v475, 0.0
        %v511 = vmax.f32 %v478, 0.0
        %v512 = vmax.f32 %v483, 0.0
        %v513 = vmax.f32 %v486, 0.0
        %v514 = vmax.f32 %v491, 0.0
        %v515 = vmax.f32 %v494, 0.0
        %v516 = vmax.f32 %v499, 0.0
        %v517 = vpack.c.bf16 %v505, %v504
        %v518 = vpack.c.bf16 %v507, %v506
        %v519 = vpack.c.bf16 %v509, %v508
        %v520 = vpack.c.bf16 %v511, %v510
        %v521 = vpack.c.bf16 %v513, %v512
        %v522 = vpack.c.bf16 %v515, %v514
        %v523 = vpack.c.bf16 %v516, %v516
        %v531 = vunpack.c.l.b16 %v517
        %v532 = vunpack.c.h.b16 %v517
        %v533 = vunpack.c.l.b16 %v518
        %v534 = vunpack.c.h.b16 %v518
        %v535 = vunpack.c.l.b16 %v519
        %v536 = vunpack.c.h.b16 %v519
        %v537 = vunpack.c.l.b16 %v520
        %v538 = vunpack.c.h.b16 %v520
        %v539 = vunpack.c.l.b16 %v521
        %v540 = vunpack.c.h.b16 %v521
        %v541 = vunpack.c.l.b16 %v522
        %v542 = vunpack.c.h.b16 %v522
        %v543 = vunpack.c.l.b16 %v523
        %v544 = vpack.c.b16 %v531, %v531
        %v545 = vpack.c.b16 %v532, %v532
        %v546 = vpack.c.b16 %v533, %v533
        %v547 = vpack.c.b16 %v534, %v534
        %v548 = vpack.c.b16 %v535, %v535
        %v549 = vpack.c.b16 %v536, %v536
        %v550 = vpack.c.b16 %v537, %v537
        %v551 = vpack.c.b16 %v538, %v538
        %v552 = vpack.c.b16 %v539, %v539
        %v553 = vpack.c.b16 %v540, %v540
        %v554 = vpack.c.b16 %v541, %v541
        %v555 = vpack.c.b16 %v542, %v542
        %v556 = vpack.c.b16 %v543, %v543
        %vm570 = vcmask 257024
        %571 = vst.msk [vmem:[%s177] sm:$0xf] %vm570, %v544
        %572 = vst.msk [vmem:[%s177 + $0x4] sm:$0xf] %vm570, %v545
        %573 = vst.msk [vmem:[%s177 + $0x8] sm:$0xf] %vm570, %v546
        %574 = vst.msk [vmem:[%s177 + $0xc] sm:$0xf] %vm570, %v547
        %575 = vst.msk [vmem:[%s177 + $0x10] sm:$0xf] %vm570, %v548
        %576 = vst.msk [vmem:[%s177 + $0x14] sm:$0xf] %vm570, %v549
        %577 = vst.msk [vmem:[%s177 + $0x18] sm:$0xf] %vm570, %v550
        %578 = vst.msk [vmem:[%s177 + $0x1c] sm:$0xf] %vm570, %v551
        %579 = vst.msk [vmem:[%s177 + $0x20] sm:$0xf] %vm570, %v552
        %580 = vst.msk [vmem:[%s177 + $0x24] sm:$0xf] %vm570, %v553
        %581 = vst.msk [vmem:[%s177 + $0x28] sm:$0xf] %vm570, %v554
        %582 = vst.msk [vmem:[%s177 + $0x2c] sm:$0xf] %vm570, %v555
        %583 = vst.msk [vmem:[%s177 + $0x30] sm:$0xf] %vm570, %v556
        %s584 = sand.u32 %s90, 1
        %s585 = sand.u32 %s90, 1
        %s586 = smul.addr %s585, 52
        %s587 = scalar_lea.vmem [#allocation2], %s586
        // Predicated region
        $region33: #{_lambda_.4} parent=31 // pred_check
          %p588 = pneg %p100
        $region34: #{_lambda_.4} parent=31 // pred_check_branch
          %590 = sbr.rel (%p588) target = $region36
        $region35: #{_lambda_.4} parent=31 // pred_region
          %s591 = smul.u32 13, %s14
          %s592 = ssub.s32 25, %s591
          %p593 = scmp.lt.s32.totalorder %s592, 13
          %s594 = scalar_select %p593, %s592, 13
          %s595 = smul.u32 64, %s594
          %p596 = scmp.ne.s32.totalorder 0, %s595
          %s597 = smul.addr %s591, 4
          %s598 = scalar_lea.vmem %s3, %s597
          // Predicated region
          $region37: #{_lambda_.4} parent=35 // pred_check
            %p599 = pneg %p596
          $region38: #{_lambda_.4} parent=35 // pred_check_branch
            %601 = sbr.rel (%p599) target = $region40
          $region39: #{_lambda_.4} parent=35 // pred_region
            // Predicated region
            $region41: #{_lambda_.4} parent=39 // pred_check
              _
            $region42: #{_lambda_.4} parent=39 // pred_check_branch
              %603 = sbr.rel target = $region44
            $region43: #{_lambda_.4} parent=39 // pred_region
              // Predicated region
              $region63: #{_lambda_.4} parent=43 // pred_check
                _
              $region64: #{_lambda_.4} parent=43 // pred_check_branch
                %677 = sbr.rel (0) target = $region66
              $region65: #{_lambda_.4} parent=43 // pred_region
                %s679 = sdiv.u32.pop %s594, 13
                %s680 = srem.u32.pop %s594, 13
                // While loop
                $region67: #{_lambda_.4} parent=65 // loop_pre_header
                  _
                $region68: #{_lambda_.4} parent=65 // loop_header
                  %s682 = sphi 0, %s684
                  %p683 = scmp.ge.s32.totalorder %s682, %s679
                  %s687 = sphi 0, %s718
                  %s688 = sphi %s587, %s721
                  %s689 = sphi %s598, %s722
                $region69: #{_lambda_.4} parent=65 // loop_header_branch
                  %686 = sbr.rel (%p683) target = $region73
                $region70: #{_lambda_.4} parent=65 // loop_body
                  %v690 = vld [vmem:[%s688] sm:$0xf]
                  %691 = vst [vmem:[%s689] sm:$0xf] %v690
                  %v692 = vld [vmem:[%s688 + $0x4] sm:$0xf]
                  %693 = vst [vmem:[%s689 + $0x4] sm:$0xf] %v692
                  %v694 = vld [vmem:[%s688 + $0x8] sm:$0xf]
                  %695 = vst [vmem:[%s689 + $0x8] sm:$0xf] %v694
                  %v696 = vld [vmem:[%s688 + $0xc] sm:$0xf]
                  %697 = vst [vmem:[%s689 + $0xc] sm:$0xf] %v696
                  %v698 = vld [vmem:[%s688 + $0x10] sm:$0xf]
                  %699 = vst [vmem:[%s689 + $0x10] sm:$0xf] %v698
                  %v700 = vld [vmem:[%s688 + $0x14] sm:$0xf]
                  %701 = vst [vmem:[%s689 + $0x14] sm:$0xf] %v700
                  %v702 = vld [vmem:[%s688 + $0x18] sm:$0xf]
                  %703 = vst [vmem:[%s689 + $0x18] sm:$0xf] %v702
                  %v704 = vld [vmem:[%s688 + $0x1c] sm:$0xf]
                  %705 = vst [vmem:[%s689 + $0x1c] sm:$0xf] %v704
                  %v706 = vld [vmem:[%s688 + $0x20] sm:$0xf]
                  %707 = vst [vmem:[%s689 + $0x20] sm:$0xf] %v706
                  %v708 = vld [vmem:[%s688 + $0x24] sm:$0xf]
                  %709 = vst [vmem:[%s689 + $0x24] sm:$0xf] %v708
                  %v710 = vld [vmem:[%s688 + $0x28] sm:$0xf]
                  %711 = vst [vmem:[%s689 + $0x28] sm:$0xf] %v710
                  %v712 = vld [vmem:[%s688 + $0x2c] sm:$0xf]
                  %713 = vst [vmem:[%s689 + $0x2c] sm:$0xf] %v712
                  %v714 = vld [vmem:[%s688 + $0x30] sm:$0xf]
                  %715 = vst [vmem:[%s689 + $0x30] sm:$0xf] %v714
                  %s716 = sadd.s32 1, %s687
                  %p717 = scmp.ge.s32.totalorder %s716, %s679
                  %s718 = scalar_select %p717, 0, %s716
                  %s719 = smul.u32 %s718, 52
                  %s720 = smul.u32 %s718, 52
                  %s721 = scalar_lea.vmem %s587, %s719 [#allocation2]
                  %s722 = scalar_lea.vmem %s598, %s720
                $region71: #{_lambda_.4} parent=65 // loop_footer
                  %s684 = sadd.s32 %s682, 1
                $region72: #{_lambda_.4} parent=65 // loop_footer_branch
                  %681 = sbr.rel target = $region68
                $region73: #{_lambda_.4} parent=65 // loop_exit
                  _
                %s723 = sdiv.u32.pop %s594, 13
                %s724 = srem.u32.pop %s594, 13
                %s725 = smul.u32 %s723, 13
                %s726 = smul.u32 4, %s725
                %s727 = scalar_lea.vmem %s587, %s726 [#allocation2]
                %s728 = smul.u32 4, %s725
                %s729 = scalar_lea.vmem %s598, %s728
                // While loop
                $region74: #{_lambda_.4} parent=65 // loop_pre_header
                  _
                $region75: #{_lambda_.4} parent=65 // loop_header
                  %s731 = sphi 0, %s733
                  %p732 = scmp.ge.s32.totalorder %s731, %s724
                  %s736 = sphi 0, %s743
                  %s737 = sphi %s727, %s746
                  %s738 = sphi %s729, %s747
                $region76: #{_lambda_.4} parent=65 // loop_header_branch
                  %735 = sbr.rel (%p732) target = $region80
                $region77: #{_lambda_.4} parent=65 // loop_body
                  %v739 = vld [vmem:[%s737] sm:$0xf]
                  %740 = vst [vmem:[%s738] sm:$0xf] %v739
                  %s741 = sadd.s32 1, %s736
                  %p742 = scmp.ge.s32.totalorder %s741, %s724
                  %s743 = scalar_select %p742, 0, %s741
                  %s744 = smul.u32 %s743, 4
                  %s745 = smul.u32 %s743, 4
                  %s746 = scalar_lea.vmem %s727, %s744 [#allocation2]
                  %s747 = scalar_lea.vmem %s729, %s745
                $region78: #{_lambda_.4} parent=65 // loop_footer
                  %s733 = sadd.s32 %s731, 1
                $region79: #{_lambda_.4} parent=65 // loop_footer_branch
                  %730 = sbr.rel target = $region75
                $region80: #{_lambda_.4} parent=65 // loop_exit
                  _
              $region66: #{_lambda_.4} parent=43 // pred_fallthru
                _
            $region44: #{_lambda_.4} parent=39 // pred_fallthru
              _
            // Predicated region
            $region45: #{_lambda_.4} parent=39 // pred_check
              _
            $region46: #{_lambda_.4} parent=39 // pred_check_branch
              %605 = sbr.rel (0) target = $region48
            $region47: #{_lambda_.4} parent=39 // pred_region
              %s607 = sdiv.u32.pop %s594, 13
              %s608 = srem.u32.pop %s594, 13
              // While loop
              $region49: #{_lambda_.4} parent=47 // loop_pre_header
                _
              $region50: #{_lambda_.4} parent=47 // loop_header
                %s610 = sphi 0, %s612
                %p611 = scmp.ge.s32.totalorder %s610, %s607
                %s615 = sphi 0, %s646
                %s616 = sphi %s587, %s649
                %s617 = sphi %s598, %s650
              $region51: #{_lambda_.4} parent=47 // loop_header_branch
                %614 = sbr.rel (%p611) target = $region55
              $region52: #{_lambda_.4} parent=47 // loop_body
                %v618 = vld [vmem:[%s616] sm:$0xf]
                %619 = vst [vmem:[%s617] sm:$0xf] %v618
                %v620 = vld [vmem:[%s616 + $0x4] sm:$0xf]
                %621 = vst [vmem:[%s617 + $0x4] sm:$0xf] %v620
                %v622 = vld [vmem:[%s616 + $0x8] sm:$0xf]
                %623 = vst [vmem:[%s617 + $0x8] sm:$0xf] %v622
                %v624 = vld [vmem:[%s616 + $0xc] sm:$0xf]
                %625 = vst [vmem:[%s617 + $0xc] sm:$0xf] %v624
                %v626 = vld [vmem:[%s616 + $0x10] sm:$0xf]
                %627 = vst [vmem:[%s617 + $0x10] sm:$0xf] %v626
                %v628 = vld [vmem:[%s616 + $0x14] sm:$0xf]
                %629 = vst [vmem:[%s617 + $0x14] sm:$0xf] %v628
                %v630 = vld [vmem:[%s616 + $0x18] sm:$0xf]
                %631 = vst [vmem:[%s617 + $0x18] sm:$0xf] %v630
                %v632 = vld [vmem:[%s616 + $0x1c] sm:$0xf]
                %633 = vst [vmem:[%s617 + $0x1c] sm:$0xf] %v632
                %v634 = vld [vmem:[%s616 + $0x20] sm:$0xf]
                %635 = vst [vmem:[%s617 + $0x20] sm:$0xf] %v634
                %v636 = vld [vmem:[%s616 + $0x24] sm:$0xf]
                %637 = vst [vmem:[%s617 + $0x24] sm:$0xf] %v636
                %v638 = vld [vmem:[%s616 + $0x28] sm:$0xf]
                %639 = vst [vmem:[%s617 + $0x28] sm:$0xf] %v638
                %v640 = vld [vmem:[%s616 + $0x2c] sm:$0xf]
                %641 = vst [vmem:[%s617 + $0x2c] sm:$0xf] %v640
                %v642 = vld [vmem:[%s616 + $0x30] sm:$0xf]
                %643 = vst [vmem:[%s617 + $0x30] sm:$0xf] %v642
                %s644 = sadd.s32 1, %s615
                %p645 = scmp.ge.s32.totalorder %s644, %s607
                %s646 = scalar_select %p645, 0, %s644
                %s647 = smul.u32 %s646, 52
                %s648 = smul.u32 %s646, 52
                %s649 = scalar_lea.vmem %s587, %s647 [#allocation2]
                %s650 = scalar_lea.vmem %s598, %s648
              $region53: #{_lambda_.4} parent=47 // loop_footer
                %s612 = sadd.s32 %s610, 1
              $region54: #{_lambda_.4} parent=47 // loop_footer_branch
                %609 = sbr.rel target = $region50
              $region55: #{_lambda_.4} parent=47 // loop_exit
                _
              %s651 = sdiv.u32.pop %s594, 13
              %s652 = srem.u32.pop %s594, 13
              %s653 = smul.u32 %s651, 13
              %s654 = smul.u32 4, %s653
              %s655 = scalar_lea.vmem %s587, %s654 [#allocation2]
              %s656 = smul.u32 4, %s653
              %s657 = scalar_lea.vmem %s598, %s656
              // While loop
              $region56: #{_lambda_.4} parent=47 // loop_pre_header
                _
              $region57: #{_lambda_.4} parent=47 // loop_header
                %s659 = sphi 0, %s661
                %p660 = scmp.ge.s32.totalorder %s659, %s652
                %s664 = sphi 0, %s671
                %s665 = sphi %s655, %s674
                %s666 = sphi %s657, %s675
              $region58: #{_lambda_.4} parent=47 // loop_header_branch
                %663 = sbr.rel (%p660) target = $region62
              $region59: #{_lambda_.4} parent=47 // loop_body
                %v667 = vld [vmem:[%s665] sm:$0xf]
                %668 = vst [vmem:[%s666] sm:$0xf] %v667
                %s669 = sadd.s32 1, %s664
                %p670 = scmp.ge.s32.totalorder %s669, %s652
                %s671 = scalar_select %p670, 0, %s669
                %s672 = smul.u32 %s671, 4
                %s673 = smul.u32 %s671, 4
                %s674 = scalar_lea.vmem %s655, %s672 [#allocation2]
                %s675 = scalar_lea.vmem %s657, %s673
              $region60: #{_lambda_.4} parent=47 // loop_footer
                %s661 = sadd.s32 %s659, 1
              $region61: #{_lambda_.4} parent=47 // loop_footer_branch
                %658 = sbr.rel target = $region57
              $region62: #{_lambda_.4} parent=47 // loop_exit
                _
            $region48: #{_lambda_.4} parent=39 // pred_fallthru
              _
          $region40: #{_lambda_.4} parent=35 // pred_fallthru
            _
          %748 = vnop
        $region36: #{_lambda_.4} parent=31 // pred_fallthru
          _
      $region32: #{_lambda_.4} parent=5 // pred_fallthru
        _
      %p749 = scmp.le.s32.totalorder 2, %s9
      // Predicated region
      $region81: #{_lambda_.4} parent=5 // pred_check
        %p750 = pneg %p749
      $region82: #{_lambda_.4} parent=5 // pred_check_branch
        %752 = sbr.rel (%p750) target = $region84
      $region83: #{_lambda_.4} parent=5 // pred_region
        %s753 = ssub.s32 %s9, 2
        // Predicated region
        $region85: #{_lambda_.4} parent=83 // pred_check
          %p754 = pneg %p106
        $region86: #{_lambda_.4} parent=83 // pred_check_branch
          %756 = sbr.rel (%p754) target = $region88
        $region87: #{_lambda_.4} parent=83 // pred_region
          %s757 = sand.u32 %s91, 1
          %s758 = sand.u32 %s91, 1
          %s759 = smul.addr %s758, 52
          %s760 = scalar_lea.vmem [#allocation2], %s759
        $region88: #{_lambda_.4} parent=83 // pred_fallthru
          _
      $region84: #{_lambda_.4} parent=5 // pred_fallthru
        _
    $region6: #{_lambda_.4} parent=1 // loop_footer
      %s13 = sadd.s32 1, %s9
    $region7: #{_lambda_.4} parent=1 // loop_footer_branch
      %8 = sbr.rel target = $region3
    $region8: #{_lambda_.4} parent=1 // loop_exit
      _

// kernel: _lambda_.5
$region0: #{_lambda_.5}
  #allocation0 [shape = 'u32[]', space=smem, size = 0x4, offset = 0x4, fixed_abs, tag = 'smem constant byte address 0x4 - core index']
  #allocation1 [shape = 'u32[144,128]{1,0:T(1,128)}', space=vmem, size = 0x12000, scoped, tag = 'internal scratch']
  %s0 = inlined_call_operand.vmem [shape: bf16[32,512], index: 0, kind: input, shape index: {}]
  %s1 = inlined_call_operand.vmem [shape: bf16[512,64], index: 1, kind: input, shape index: {}]
  %s2 = inlined_call_operand.vmem [shape: f32[1,64], index: 2, kind: input, shape index: {}]
  %s3 = inlined_call_operand.vmem [shape: bf16[32,64], index: 3, kind: output, shape index: {}]
  %s4 = sld [smem:[#allocation0]]
  $region45: #{_lambda_.5} parent=0
    _
  %s6 = ssub.s32 1, %s4
  %s7 = scalar_select 0, %s6, %s4
  loop: start=0, step=1, limit=4
  $region2: #{_lambda_.5} parent=0 // loop_pre_header
    _
  $region3: #{_lambda_.5} parent=0 // loop_header
    %s9 = sphi 0, %s13
    %p10 = scmp.ge.s32.totalorder %s9, 4
    %s19 = sphi 0, %s21
    %s22 = sphi 0, %s19
    %s23 = sphi 0, %s22
    %s39 = sphi 0, %s23
    %s43 = sphi 0, %s43
    %s45 = sphi 0, %s43
    %s46 = sphi 0, %s45
    %s60 = sphi 0, %s46
    %s64 = sphi 0, %s64
    %s66 = sphi 0, %s64
    %s67 = sphi 0, %s66
    %s81 = sphi 0, %s67
    %s87 = sphi 0, %s89
    %s90 = sphi 0, %s87
    %s91 = sphi 0, %s90
    %s107 = sphi 0, %s91
  $region4: #{_lambda_.5} parent=0 // loop_header_branch
    %12 = sbr.rel (%p10) target = $region8
  $region5: #{_lambda_.5} parent=0 // loop_body
    %s14 = ssub.s32 %s9, 1
    %s15 = ssub.s32 %s9, 2
    %s16 = sadd.s32 %s9, 1
    %s17 = ssub.s32 %s9, %s16
    %p18 = scmp.eq.s32.totalorder %s17, 0
    %s20 = sadd.s32 %s19, 1
    %s21 = scalar_select %p18, %s19, %s20
    %p24 = pneg %p18
    %p25 = scmp.eq.s32.totalorder %s9, 1
    %p26 = por %p24, %p25
    %p27 = scmp.ne.s32.totalorder %s19, %s22
    %p28 = scmp.eq.s32.totalorder %s9, 0
    %p29 = por %p27, %p28
    %p30 = scmp.ne.s32.totalorder %s19, %s22
    %p31 = scmp.eq.s32.totalorder %s14, 1
    %p32 = por %p30, %p31
    %p33 = scmp.ne.s32.totalorder %s22, %s23
    %p34 = scmp.eq.s32.totalorder %s14, 0
    %p35 = por %p33, %p34
    %p36 = scmp.ne.s32.totalorder %s22, %s23
    %p37 = scmp.eq.s32.totalorder %s15, 1
    %p38 = por %p36, %p37
    %p40 = scmp.ne.s32.totalorder %s23, %s39
    %p41 = scmp.eq.s32.totalorder %s15, 0
    %p42 = por %p40, %p41
    %s44 = sadd.s32 %s43, 1
    %p47 = scmp.eq.s32.totalorder %s9, 1
    %p48 = scmp.ne.s32.totalorder %s43, %s45
    %p49 = scmp.eq.s32.totalorder %s9, 0
    %p50 = por %p48, %p49
    %p51 = scmp.ne.s32.totalorder %s43, %s45
    %p52 = scmp.eq.s32.totalorder %s14, 1
    %p53 = por %p51, %p52
    %p54 = scmp.ne.s32.totalorder %s45, %s46
    %p55 = scmp.eq.s32.totalorder %s14, 0
    %p56 = por %p54, %p55
    %p57 = scmp.ne.s32.totalorder %s45, %s46
    %p58 = scmp.eq.s32.totalorder %s15, 1
    %p59 = por %p57, %p58
    %p61 = scmp.ne.s32.totalorder %s46, %s60
    %p62 = scmp.eq.s32.totalorder %s15, 0
    %p63 = por %p61, %p62
    %s65 = sadd.s32 %s64, 1
    %p68 = scmp.eq.s32.totalorder %s9, 1
    %p69 = scmp.ne.s32.totalorder %s64, %s66
    %p70 = scmp.eq.s32.totalorder %s9, 0
    %p71 = por %p69, %p70
    %p72 = scmp.ne.s32.totalorder %s64, %s66
    %p73 = scmp.eq.s32.totalorder %s14, 1
    %p74 = por %p72, %p73
    %p75 = scmp.ne.s32.totalorder %s66, %s67
    %p76 = scmp.eq.s32.totalorder %s14, 0
    %p77 = por %p75, %p76
    %p78 = scmp.ne.s32.totalorder %s66, %s67
    %p79 = scmp.eq.s32.totalorder %s15, 1
    %p80 = por %p78, %p79
    %p82 = scmp.ne.s32.totalorder %s67, %s81
    %p83 = scmp.eq.s32.totalorder %s15, 0
    %p84 = por %p82, %p83
    %s85 = ssub.s32 %s9, %s16
    %p86 = scmp.eq.s32.totalorder %s85, 0
    %s88 = sadd.s32 %s87, 1
    %s89 = scalar_select %p86, %s87, %s88
    %p92 = pneg %p86
    %p93 = scmp.eq.s32.totalorder %s9, 1
    %p94 = por %p92, %p93
    %p95 = scmp.ne.s32.totalorder %s87, %s90
    %p96 = scmp.eq.s32.totalorder %s9, 0
    %p97 = por %p95, %p96
    %p98 = scmp.ne.s32.totalorder %s87, %s90
    %p99 = scmp.eq.s32.totalorder %s14, 1
    %p100 = por %p98, %p99
    %p101 = scmp.ne.s32.totalorder %s90, %s91
    %p102 = scmp.eq.s32.totalorder %s14, 0
    %p103 = por %p101, %p102
    %p104 = scmp.ne.s32.totalorder %s90, %s91
    %p105 = scmp.eq.s32.totalorder %s15, 1
    %p106 = por %p104, %p105
    %p108 = scmp.ne.s32.totalorder %s91, %s107
    %p109 = scmp.eq.s32.totalorder %s15, 0
    %p110 = por %p108, %p109
    %p111 = scmp.le.s32.totalorder 1, %s9
    %p112 = scmp.lt.s32.totalorder %s9, 3
    %p113 = pnand %p111, %p112
    %p114 = pneg %p113
    // Predicated region
    $region9: #{_lambda_.5} parent=5 // pred_check
      _
    $region10: #{_lambda_.5} parent=5 // pred_check_branch
      %116 = sbr.rel (%p113) target = $region12
    $region11: #{_lambda_.5} parent=5 // pred_region
      %s117 = ssub.s32 %s9, 1
      // Predicated region
      $region13: #{_lambda_.5} parent=11 // pred_check
        %p118 = pneg %p56
      $region14: #{_lambda_.5} parent=11 // pred_check_branch
        %120 = sbr.rel (%p118) target = $region16
      $region15: #{_lambda_.5} parent=11 // pred_region
        _
      $region16: #{_lambda_.5} parent=11 // pred_fallthru
        _
      // Predicated region
      $region17: #{_lambda_.5} parent=11 // pred_check
        %p121 = pneg %p77
      $region18: #{_lambda_.5} parent=11 // pred_check_branch
        %123 = sbr.rel (%p121) target = $region20
      $region19: #{_lambda_.5} parent=11 // pred_region
        _
      $region20: #{_lambda_.5} parent=11 // pred_fallthru
        _
    $region12: #{_lambda_.5} parent=5 // pred_fallthru
      _
    %p124 = scmp.lt.s32.totalorder %s9, 2
    // Predicated region
    $region21: #{_lambda_.5} parent=5 // pred_check
      %p125 = pneg %p124
    $region22: #{_lambda_.5} parent=5 // pred_check_branch
      %127 = sbr.rel (%p125) target = $region24
    $region23: #{_lambda_.5} parent=5 // pred_region
      // Predicated region
      $region25: #{_lambda_.5} parent=23 // pred_check
        %p128 = pneg %p29
      $region26: #{_lambda_.5} parent=23 // pred_check_branch
        %130 = sbr.rel (%p128) target = $region28
      $region27: #{_lambda_.5} parent=23 // pred_region
        %s131 = smul.u32 2, %s9
        %p132 = scmp.lt.s32.totalorder %s131, 3
        %s133 = scalar_select %p132, %s131, 3
        %s134 = smul.addr %s133, 4
        %s135 = smul.addr %s134, 4
        %s136 = scalar_lea.vmem %s0, %s135
        %s137 = smul.u32 2, %s9
      $region28: #{_lambda_.5} parent=23 // pred_fallthru
        _
    $region24: #{_lambda_.5} parent=5 // pred_fallthru
      _
    %p138 = scmp.le.s32.totalorder 1, %s9
    %p139 = scmp.lt.s32.totalorder %s9, 3
    %p140 = pnand %p138, %p139
    %p141 = pneg %p140
    // Predicated region
    $region29: #{_lambda_.5} parent=5 // pred_check
      _
    $region30: #{_lambda_.5} parent=5 // pred_check_branch
      %143 = sbr.rel (%p140) target = $region32
    $region31: #{_lambda_.5} parent=5 // pred_region
      %s144 = ssub.s32 %s9, 1
      %s145 = smul.u32 2, %s14
      %p146 = scmp.lt.s32.totalorder %s145, 3
      %s147 = scalar_select %p146, %s145, 3
      %s148 = smul.addr %s147, 4
      %s149 = smul.addr %s148, 4
      %s150 = scalar_lea.vmem %s0, %s149
      %p151 = pneg %p35
      %p152 = pneg %p32
      %p153 = pneg %p56
      %p154 = pneg %p53
      %p155 = pneg %p77
      %p156 = pneg %p74
      %p157 = pneg %p103
      %p158 = pneg %p100
      %s159 = smul.u32 2, %s14
      %p160 = scmp.lt.s32.totalorder %s159, 3
      %s161 = scalar_select %p160, %s159, 3
      %s162 = smul.addr %s161, 4
      %s163 = scalar_lea.vmem %s3, %s162
      %s164 = smul.u32 2, %s14
      %p165 = scmp.lt.s32.totalorder %s164, 3
      %s166 = scalar_select %p165, %s164, 3
      %s167 = smul.addr %s166, 4
      %s168 = smul.addr %s167, 4
      %s169 = scalar_lea.vmem %s0, %s168
      %s170 = smul.u32 2, %s14
      %s171 = smul.u32 2, %s14
      %p172 = scmp.lt.s32.totalorder %s171, 3
      %s173 = scalar_select %p172, %s171, 3
      %s174 = smul.addr %s173, 4
      %s175 = scalar_lea.vmem %s3, %s174
      %s176 = smul.u32 2, %s14
      %v178 = vld [vmem:[%s169] sm:$0xff]
      %v179 = vld [vmem:[%s169 + $0x8] sm:$0xff]
      %v180 = vld [vmem:[%s169 + $0x10] sm:$0xff]
      %v181 = vld [vmem:[%s169 + $0x18] sm:$0xff]
      %v182 = vld [vmem:[%s1] sm:$0xf]
      %v183 = vld [vmem:[%s1 + $0x4] sm:$0xf]
      %v184 = vld [vmem:[%s1 + $0x8] sm:$0xf]
      %v185 = vld [vmem:[%s1 + $0xc] sm:$0xf]
      %v186 = vld [vmem:[%s1 + $0x10] sm:$0xf]
      %v187 = vld [vmem:[%s1 + $0x14] sm:$0xf]
      %v188 = vld [vmem:[%s1 + $0x18] sm:$0xf]
      %v189 = vld [vmem:[%s1 + $0x1c] sm:$0xf]
      %v190 = vld [vmem:[%s1 + $0x20] sm:$0xf]
      %v191 = vld [vmem:[%s1 + $0x24] sm:$0xf]
      %v192 = vld [vmem:[%s1 + $0x28] sm:$0xf]
      %v193 = vld [vmem:[%s1 + $0x2c] sm:$0xf]
      %v194 = vld [vmem:[%s1 + $0x30] sm:$0xf]
      %v195 = vld [vmem:[%s1 + $0x34] sm:$0xf]
      %v196 = vld [vmem:[%s1 + $0x38] sm:$0xf]
      %v197 = vld [vmem:[%s1 + $0x3c] sm:$0xf]
      %v198 = vld [vmem:[%s1 + $0x40] sm:$0xf]
      %v199 = vld [vmem:[%s1 + $0x44] sm:$0xf]
      %v200 = vld [vmem:[%s1 + $0x48] sm:$0xf]
      %v201 = vld [vmem:[%s1 + $0x4c] sm:$0xf]
      %v202 = vld [vmem:[%s1 + $0x50] sm:$0xf]
      %v203 = vld [vmem:[%s1 + $0x54] sm:$0xf]
      %v204 = vld [vmem:[%s1 + $0x58] sm:$0xf]
      %v205 = vld [vmem:[%s1 + $0x5c] sm:$0xf]
      %v206 = vld [vmem:[%s1 + $0x60] sm:$0xf]
      %v207 = vld [vmem:[%s1 + $0x64] sm:$0xf]
      %v208 = vld [vmem:[%s1 + $0x68] sm:$0xf]
      %v209 = vld [vmem:[%s1 + $0x6c] sm:$0xf]
      %v210 = vld [vmem:[%s1 + $0x70] sm:$0xf]
      %v211 = vld [vmem:[%s1 + $0x74] sm:$0xf]
      %v212 = vld [vmem:[%s1 + $0x78] sm:$0xf]
      %v213 = vld [vmem:[%s1 + $0x7c] sm:$0xf]
      %v214 = vld [vmem:[%s1 + $0x80] sm:$0xf]
      %v215 = vld [vmem:[%s1 + $0x84] sm:$0xf]
      %v216 = vld [vmem:[%s1 + $0x88] sm:$0xf]
      %v217 = vld [vmem:[%s1 + $0x8c] sm:$0xf]
      %v218 = vld [vmem:[%s1 + $0x90] sm:$0xf]
      %v219 = vld [vmem:[%s1 + $0x94] sm:$0xf]
      %v220 = vld [vmem:[%s1 + $0x98] sm:$0xf]
      %v221 = vld [vmem:[%s1 + $0x9c] sm:$0xf]
      %v222 = vld [vmem:[%s1 + $0xa0] sm:$0xf]
      %v223 = vld [vmem:[%s1 + $0xa4] sm:$0xf]
      %v224 = vld [vmem:[%s1 + $0xa8] sm:$0xf]
      %v225 = vld [vmem:[%s1 + $0xac] sm:$0xf]
      %v226 = vld [vmem:[%s1 + $0xb0] sm:$0xf]
      %v227 = vld [vmem:[%s1 + $0xb4] sm:$0xf]
      %v228 = vld [vmem:[%s1 + $0xb8] sm:$0xf]
      %v229 = vld [vmem:[%s1 + $0xbc] sm:$0xf]
      %v230 = vld [vmem:[%s1 + $0xc0] sm:$0xf]
      %v231 = vld [vmem:[%s1 + $0xc4] sm:$0xf]
      %v232 = vld [vmem:[%s1 + $0xc8] sm:$0xf]
      %v233 = vld [vmem:[%s1 + $0xcc] sm:$0xf]
      %v234 = vld [vmem:[%s1 + $0xd0] sm:$0xf]
      %v235 = vld [vmem:[%s1 + $0xd4] sm:$0xf]
      %v236 = vld [vmem:[%s1 + $0xd8] sm:$0xf]
      %v237 = vld [vmem:[%s1 + $0xdc] sm:$0xf]
      %v238 = vld [vmem:[%s1 + $0xe0] sm:$0xf]
      %v239 = vld [vmem:[%s1 + $0xe4] sm:$0xf]
      %v240 = vld [vmem:[%s1 + $0xe8] sm:$0xf]
      %v241 = vld [vmem:[%s1 + $0xec] sm:$0xf]
      %v242 = vld [vmem:[%s1 + $0xf0] sm:$0xf]
      %v243 = vld [vmem:[%s1 + $0xf4] sm:$0xf]
      %v244 = vld [vmem:[%s1 + $0xf8] sm:$0xf]
      %v245 = vld [vmem:[%s1 + $0xfc] sm:$0xf]
      %v246 = vld [vmem:[%s2] sm:$0x1]
      %v248 = vlaneseq
      %v249 = vshrl.u32 %v248, 7
      %v250 = vsub.s32 0, %v249
      %v251 = vrot.slane %v246, %v250
      %v257 = vunpack.c.l.b16 %v178
      %v258 = vunpack.c.h.b16 %v178
      %v259 = vunpack.c.l.b16 %v179
      %v260 = vunpack.c.h.b16 %v179
      %v261 = vunpack.c.l.b16 %v180
      %v262 = vunpack.c.h.b16 %v180
      %v263 = vunpack.c.l.b16 %v181
      %v264 = vunpack.c.h.b16 %v181
      %v265 = vpack.c.b16 %v261, %v257
      %v266 = vpack.c.b16 %v262, %v258
      %v267 = vpack.c.b16 %v263, %v259
      %v268 = vpack.c.b16 %v264, %v260
      %v337 = vunpack.c.l.b16 %v182
      %v338 = vunpack.c.l.b16 %v183
      %v339 = vunpack.c.l.b16 %v184
      %v340 = vunpack.c.l.b16 %v185
      %v341 = vunpack.c.l.b16 %v186
      %v342 = vunpack.c.l.b16 %v187
      %v343 = vunpack.c.l.b16 %v188
      %v344 = vunpack.c.l.b16 %v189
      %v345 = vunpack.c.l.b16 %v190
      %v346 = vunpack.c.l.b16 %v191
      %v347 = vunpack.c.l.b16 %v192
      %v348 = vunpack.c.l.b16 %v193
      %v349 = vunpack.c.l.b16 %v194
      %v350 = vunpack.c.l.b16 %v195
      %v351 = vunpack.c.l.b16 %v196
      %v352 = vunpack.c.l.b16 %v197
      %v353 = vunpack.c.l.b16 %v198
      %v354 = vunpack.c.l.b16 %v199
      %v355 = vunpack.c.l.b16 %v200
      %v356 = vunpack.c.l.b16 %v201
      %v357 = vunpack.c.l.b16 %v202
      %v358 = vunpack.c.l.b16 %v203
      %v359 = vunpack.c.l.b16 %v204
      %v360 = vunpack.c.l.b16 %v205
      %v361 = vunpack.c.l.b16 %v206
      %v362 = vunpack.c.l.b16 %v207
      %v363 = vunpack.c.l.b16 %v208
      %v364 = vunpack.c.l.b16 %v209
      %v365 = vunpack.c.l.b16 %v210
      %v366 = vunpack.c.l.b16 %v211
      %v367 = vunpack.c.l.b16 %v212
      %v368 = vunpack.c.l.b16 %v213
      %v369 = vunpack.c.l.b16 %v214
      %v370 = vunpack.c.l.b16 %v215
      %v371 = vunpack.c.l.b16 %v216
      %v372 = vunpack.c.l.b16 %v217
      %v373 = vunpack.c.l.b16 %v218
      %v374 = vunpack.c.l.b16 %v219
      %v375 = vunpack.c.l.b16 %v220
      %v376 = vunpack.c.l.b16 %v221
      %v377 = vunpack.c.l.b16 %v222
      %v378 = vunpack.c.l.b16 %v223
      %v379 = vunpack.c.l.b16 %v224
      %v380 = vunpack.c.l.b16 %v225
      %v381 = vunpack.c.l.b16 %v226
      %v382 = vunpack.c.l.b16 %v227
      %v383 = vunpack.c.l.b16 %v228
      %v384 = vunpack.c.l.b16 %v229
      %v385 = vunpack.c.l.b16 %v230
      %v386 = vunpack.c.l.b16 %v231
      %v387 = vunpack.c.l.b16 %v232
      %v388 = vunpack.c.l.b16 %v233
      %v389 = vunpack.c.l.b16 %v234
      %v390 = vunpack.c.l.b16 %v235
      %v391 = vunpack.c.l.b16 %v236
      %v392 = vunpack.c.l.b16 %v237
      %v393 = vunpack.c.l.b16 %v238
      %v394 = vunpack.c.l.b16 %v239
      %v395 = vunpack.c.l.b16 %v240
      %v396 = vunpack.c.l.b16 %v241
      %v397 = vunpack.c.l.b16 %v242
      %v398 = vunpack.c.l.b16 %v243
      %v399 = vunpack.c.l.b16 %v244
      %v400 = vunpack.c.l.b16 %v245
      %v401 = vpack.c.b16 %v338, %v337
      %v402 = vpack.c.b16 %v340, %v339
      %v403 = vpack.c.b16 %v342, %v341
      %v404 = vpack.c.b16 %v344, %v343
      %v405 = vpack.c.b16 %v346, %v345
      %v406 = vpack.c.b16 %v348, %v347
      %v407 = vpack.c.b16 %v350, %v349
      %v408 = vpack.c.b16 %v352, %v351
      %v409 = vpack.c.b16 %v354, %v353
      %v410 = vpack.c.b16 %v356, %v355
      %v411 = vpack.c.b16 %v358, %v357
      %v412 = vpack.c.b16 %v360, %v359
      %v413 = vpack.c.b16 %v362, %v361
      %v414 = vpack.c.b16 %v364, %v363
      %v415 = vpack.c.b16 %v366, %v365
      %v416 = vpack.c.b16 %v368, %v367
      %v417 = vpack.c.b16 %v370, %v369
      %v418 = vpack.c.b16 %v372, %v371
      %v419 = vpack.c.b16 %v374, %v373
      %v420 = vpack.c.b16 %v376, %v375
      %v421 = vpack.c.b16 %v378, %v377
      %v422 = vpack.c.b16 %v380, %v379
      %v423 = vpack.c.b16 %v382, %v381
      %v424 = vpack.c.b16 %v384, %v383
      %v425 = vpack.c.b16 %v386, %v385
      %v426 = vpack.c.b16 %v388, %v387
      %v427 = vpack.c.b16 %v390, %v389
      %v428 = vpack.c.b16 %v392, %v391
      %v429 = vpack.c.b16 %v394, %v393
      %v430 = vpack.c.b16 %v396, %v395
      %v431 = vpack.c.b16 %v398, %v397
      %v432 = vpack.c.b16 %v400, %v399
      %465 = vmatprep.subr.bf16.mxu0 0
      %466 = vmatpush1.bf16.msra.mxu0 %v401
      %467 = vmatprep.subr.bf16.mxu0 0
      %468 = vmatpush1.bf16.msra.mxu0 %v402
      %469 = vmatprep.subr.bf16.mxu0 0
      %470 = vmatpush1.bf16.msra.mxu0 %v403
      %471 = vmatprep.subr.bf16.mxu0 0
      %472 = vmatpush1.bf16.msra.mxu0 %v404
      %473 = vmatprep.subr.bf16.mxu0 0
      %474 = vmatpush1.bf16.msra.mxu0 %v405
      %475 = vmatprep.subr.bf16.mxu0 0
      %476 = vmatpush1.bf16.msra.mxu0 %v406
      %477 = vmatprep.subr.bf16.mxu0 0
      %478 = vmatpush1.bf16.msra.mxu0 %v407
      %479 = vmatprep.subr.bf16.mxu0 0
      %480 = vmatpush1.bf16.msra.mxu0 %v408
      %481 = vmatprep.subr.bf16.mxu0 0
      %482 = vmatpush1.bf16.msra.mxu0 %v409
      %483 = vmatprep.subr.bf16.mxu0 0
      %484 = vmatpush1.bf16.msra.mxu0 %v410
      %485 = vmatprep.subr.bf16.mxu0 0
      %486 = vmatpush1.bf16.msra.mxu0 %v411
      %487 = vmatprep.subr.bf16.mxu0 0
      %488 = vmatpush1.bf16.msra.mxu0 %v412
      %489 = vmatprep.subr.bf16.mxu0 0
      %490 = vmatpush1.bf16.msra.mxu0 %v413
      %491 = vmatprep.subr.bf16.mxu0 0
      %492 = vmatpush1.bf16.msra.mxu0 %v414
      %493 = vmatprep.subr.bf16.mxu0 0
      %494 = vmatpush1.bf16.msra.mxu0 %v415
      %495 = vmatprep.subr.bf16.mxu0 0
      %496 = vmatpush1.bf16.msra.mxu0 %v416
      %497 = vmatprep.mubr.bf16.mxu0 %v266
      %498 = vmatmul.mubr.bf16.gmra.mrb[0].mxu0 %v265
      %v499 = vpop.f32.mrb[0].mxu0
      %v500 = vadd.f32 %v251, %v499
      %v501 = vpop.f32.mrb[0].mxu0
      %v502 = vpop.f32.mrb[0].mxu0
      %v503 = vadd.f32 %v251, %v502
      %v504 = vpop.f32.mrb[0].mxu0
      %505 = vdwg.mxu0
      %506 = vmatprep.subr.bf16.mxu0 0
      %507 = vmatpush1.bf16.msra.mxu0 %v417
      %508 = vmatprep.subr.bf16.mxu0 0
      %509 = vmatpush1.bf16.msra.mxu0 %v418
      %510 = vmatprep.subr.bf16.mxu0 0
      %511 = vmatpush1.bf16.msra.mxu0 %v419
      %512 = vmatprep.subr.bf16.mxu0 0
      %513 = vmatpush1.bf16.msra.mxu0 %v420
      %514 = vmatprep.subr.bf16.mxu0 0
      %515 = vmatpush1.bf16.msra.mxu0 %v421
      %516 = vmatprep.subr.bf16.mxu0 0
      %517 = vmatpush1.bf16.msra.mxu0 %v422
      %518 = vmatprep.subr.bf16.mxu0 0
      %519 = vmatpush1.bf16.msra.mxu0 %v423
      %520 = vmatprep.subr.bf16.mxu0 0
      %521 = vmatpush1.bf16.msra.mxu0 %v424
      %522 = vmatprep.subr.bf16.mxu0 0
      %523 = vmatpush1.bf16.msra.mxu0 %v425
      %524 = vmatprep.subr.bf16.mxu0 0
      %525 = vmatpush1.bf16.msra.mxu0 %v426
      %526 = vmatprep.subr.bf16.mxu0 0
      %527 = vmatpush1.bf16.msra.mxu0 %v427
      %528 = vmatprep.subr.bf16.mxu0 0
      %529 = vmatpush1.bf16.msra.mxu0 %v428
      %530 = vmatprep.subr.bf16.mxu0 0
      %531 = vmatpush1.bf16.msra.mxu0 %v429
      %532 = vmatprep.subr.bf16.mxu0 0
      %533 = vmatpush1.bf16.msra.mxu0 %v430
      %534 = vmatprep.subr.bf16.mxu0 0
      %535 = vmatpush1.bf16.msra.mxu0 %v431
      %536 = vmatprep.subr.bf16.mxu0 0
      %537 = vmatpush1.bf16.msra.mxu0 %v432
      %538 = vmatprep.mubr.bf16.mxu0 %v268
      %539 = vmatmul.mubr.bf16.gmra.mrb[0].mxu0 %v267
      %v540 = vpop.f32.mrb[0].mxu0
      %v541 = vadd.f32 %v500, %v540
      %v542 = vpop.f32.mrb[0].mxu0
      %v543 = vpop.f32.mrb[0].mxu0
      %v544 = vadd.f32 %v503, %v543
      %v545 = vpop.f32.mrb[0].mxu0
      %546 = vdwg.mxu0
      %v547 = vmax.f32 %v541, 0.0
      %v548 = vmax.f32 %v544, 0.0
      %v549 = vpack.c.bf16 %v548, %v547
      %v551 = vunpack.c.l.b16 %v549
      %v552 = vunpack.c.h.b16 %v549
      %v553 = vpack.c.b16 %v551, %v551
      %v554 = vpack.c.b16 %v552, %v552
      %vm557 = vcmask 519168
      %558 = vst.msk [vmem:[%s175] sm:$0xf] %vm557, %v553
      %559 = vst.msk [vmem:[%s175 + $0x4] sm:$0xf] %vm557, %v554
      %s560 = smul.u32 2, %s14
      %p561 = scmp.lt.s32.totalorder %s560, 3
      %s562 = scalar_select %p561, %s560, 3
      %s563 = smul.addr %s562, 4
      %s564 = scalar_lea.vmem %s3, %s563
      // Predicated region
      $region33: #{_lambda_.5} parent=31 // pred_check
        %p565 = pneg %p100
      $region34: #{_lambda_.5} parent=31 // pred_check_branch
        %567 = sbr.rel (%p565) target = $region36
      $region35: #{_lambda_.5} parent=31 // pred_region
        %s568 = smul.u32 2, %s14
      $region36: #{_lambda_.5} parent=31 // pred_fallthru
        _
    $region32: #{_lambda_.5} parent=5 // pred_fallthru
      _
    %p569 = scmp.le.s32.totalorder 2, %s9
    // Predicated region
    $region37: #{_lambda_.5} parent=5 // pred_check
      %p570 = pneg %p569
    $region38: #{_lambda_.5} parent=5 // pred_check_branch
      %572 = sbr.rel (%p570) target = $region40
    $region39: #{_lambda_.5} parent=5 // pred_region
      %s573 = ssub.s32 %s9, 2
      // Predicated region
      $region41: #{_lambda_.5} parent=39 // pred_check
        %p574 = pneg %p106
      $region42: #{_lambda_.5} parent=39 // pred_check_branch
        %576 = sbr.rel (%p574) target = $region44
      $region43: #{_lambda_.5} parent=39 // pred_region
        %s577 = smul.u32 2, %s15
        %p578 = scmp.lt.s32.totalorder %s577, 3
        %s579 = scalar_select %p578, %s577, 3
        %s580 = smul.addr %s579, 4
        %s581 = scalar_lea.vmem %s3, %s580
      $region44: #{_lambda_.5} parent=39 // pred_fallthru
        _
    $region40: #{_lambda_.5} parent=5 // pred_fallthru
      _
  $region6: #{_lambda_.5} parent=0 // loop_footer
    %s13 = sadd.s32 1, %s9
  $region7: #{_lambda_.5} parent=0 // loop_footer_branch
    %8 = sbr.rel target = $region3
  $region8: #{_lambda_.5} parent=0 // loop_exit
    _

// kernel: _lambda_.6
$region0: #{_lambda_.6}
  #allocation0 [shape = 'u32[]', space=smem, size = 0x4, offset = 0x4, fixed_abs, tag = 'smem constant byte address 0x4 - core index']
  #allocation1 [shape = 'u32[144,128]{1,0:T(1,128)}', space=vmem, size = 0x12000, scoped, tag = 'internal scratch']
  %s0 = inlined_call_operand.vmem [shape: bf16[8,640], index: 0, kind: input, shape index: {}]
  %s1 = inlined_call_operand.vmem [shape: bf16[640,64], index: 1, kind: input, shape index: {}]
  %s2 = inlined_call_operand.vmem [shape: f32[1,64], index: 2, kind: input, shape index: {}]
  %s3 = inlined_call_operand.vmem [shape: bf16[8,64], index: 3, kind: output, shape index: {}]
  %s4 = sld [smem:[#allocation0]]
  $region22: #{_lambda_.6} parent=0
    _
  %s6 = ssub.s32 1, %s4
  %s7 = scalar_select 0, %s6, %s4
  // Predicated region
  $region2: #{_lambda_.6} parent=0 // pred_check
    _
  $region3: #{_lambda_.6} parent=0 // pred_check_branch
    %9 = sbr.rel (0) target = $region5
  $region4: #{_lambda_.6} parent=0 // pred_region
    _
  $region5: #{_lambda_.6} parent=0 // pred_fallthru
    _
  // Predicated region
  $region6: #{_lambda_.6} parent=0 // pred_check
    _
  $region7: #{_lambda_.6} parent=0 // pred_check_branch
    %11 = sbr.rel (0) target = $region9
  $region8: #{_lambda_.6} parent=0 // pred_region
    _
  $region9: #{_lambda_.6} parent=0 // pred_fallthru
    _
  // Predicated region
  $region10: #{_lambda_.6} parent=0 // pred_check
    _
  $region11: #{_lambda_.6} parent=0 // pred_check_branch
    %13 = sbr.rel (0) target = $region13
  $region12: #{_lambda_.6} parent=0 // pred_region
    _
  $region13: #{_lambda_.6} parent=0 // pred_fallthru
    _
  %v15 = vld [vmem:[%s0] sm:$0xff]
  %v16 = vld [vmem:[%s0 + $0x8] sm:$0xff]
  %v17 = vld [vmem:[%s0 + $0x10] sm:$0xf]
  %v18 = vld [vmem:[%s1] sm:$0xf]
  %v19 = vld [vmem:[%s1 + $0x4] sm:$0xf]
  %v20 = vld [vmem:[%s1 + $0x8] sm:$0xf]
  %v21 = vld [vmem:[%s1 + $0xc] sm:$0xf]
  %v22 = vld [vmem:[%s1 + $0x10] sm:$0xf]
  %v23 = vld [vmem:[%s1 + $0x14] sm:$0xf]
  %v24 = vld [vmem:[%s1 + $0x18] sm:$0xf]
  %v25 = vld [vmem:[%s1 + $0x1c] sm:$0xf]
  %v26 = vld [vmem:[%s1 + $0x20] sm:$0xf]
  %v27 = vld [vmem:[%s1 + $0x24] sm:$0xf]
  %v28 = vld [vmem:[%s1 + $0x28] sm:$0xf]
  %v29 = vld [vmem:[%s1 + $0x2c] sm:$0xf]
  %v30 = vld [vmem:[%s1 + $0x30] sm:$0xf]
  %v31 = vld [vmem:[%s1 + $0x34] sm:$0xf]
  %v32 = vld [vmem:[%s1 + $0x38] sm:$0xf]
  %v33 = vld [vmem:[%s1 + $0x3c] sm:$0xf]
  %v34 = vld [vmem:[%s1 + $0x40] sm:$0xf]
  %v35 = vld [vmem:[%s1 + $0x44] sm:$0xf]
  %v36 = vld [vmem:[%s1 + $0x48] sm:$0xf]
  %v37 = vld [vmem:[%s1 + $0x4c] sm:$0xf]
  %v38 = vld [vmem:[%s1 + $0x50] sm:$0xf]
  %v39 = vld [vmem:[%s1 + $0x54] sm:$0xf]
  %v40 = vld [vmem:[%s1 + $0x58] sm:$0xf]
  %v41 = vld [vmem:[%s1 + $0x5c] sm:$0xf]
  %v42 = vld [vmem:[%s1 + $0x60] sm:$0xf]
  %v43 = vld [vmem:[%s1 + $0x64] sm:$0xf]
  %v44 = vld [vmem:[%s1 + $0x68] sm:$0xf]
  %v45 = vld [vmem:[%s1 + $0x6c] sm:$0xf]
  %v46 = vld [vmem:[%s1 + $0x70] sm:$0xf]
  %v47 = vld [vmem:[%s1 + $0x74] sm:$0xf]
  %v48 = vld [vmem:[%s1 + $0x78] sm:$0xf]
  %v49 = vld [vmem:[%s1 + $0x7c] sm:$0xf]
  %v50 = vld [vmem:[%s1 + $0x80] sm:$0xf]
  %v51 = vld [vmem:[%s1 + $0x84] sm:$0xf]
  %v52 = vld [vmem:[%s1 + $0x88] sm:$0xf]
  %v53 = vld [vmem:[%s1 + $0x8c] sm:$0xf]
  %v54 = vld [vmem:[%s1 + $0x90] sm:$0xf]
  %v55 = vld [vmem:[%s1 + $0x94] sm:$0xf]
  %v56 = vld [vmem:[%s1 + $0x98] sm:$0xf]
  %v57 = vld [vmem:[%s1 + $0x9c] sm:$0xf]
  %v58 = vld [vmem:[%s1 + $0xa0] sm:$0xf]
  %v59 = vld [vmem:[%s1 + $0xa4] sm:$0xf]
  %v60 = vld [vmem:[%s1 + $0xa8] sm:$0xf]
  %v61 = vld [vmem:[%s1 + $0xac] sm:$0xf]
  %v62 = vld [vmem:[%s1 + $0xb0] sm:$0xf]
  %v63 = vld [vmem:[%s1 + $0xb4] sm:$0xf]
  %v64 = vld [vmem:[%s1 + $0xb8] sm:$0xf]
  %v65 = vld [vmem:[%s1 + $0xbc] sm:$0xf]
  %v66 = vld [vmem:[%s1 + $0xc0] sm:$0xf]
  %v67 = vld [vmem:[%s1 + $0xc4] sm:$0xf]
  %v68 = vld [vmem:[%s1 + $0xc8] sm:$0xf]
  %v69 = vld [vmem:[%s1 + $0xcc] sm:$0xf]
  %v70 = vld [vmem:[%s1 + $0xd0] sm:$0xf]
  %v71 = vld [vmem:[%s1 + $0xd4] sm:$0xf]
  %v72 = vld [vmem:[%s1 + $0xd8] sm:$0xf]
  %v73 = vld [vmem:[%s1 + $0xdc] sm:$0xf]
  %v74 = vld [vmem:[%s1 + $0xe0] sm:$0xf]
  %v75 = vld [vmem:[%s1 + $0xe4] sm:$0xf]
  %v76 = vld [vmem:[%s1 + $0xe8] sm:$0xf]
  %v77 = vld [vmem:[%s1 + $0xec] sm:$0xf]
  %v78 = vld [vmem:[%s1 + $0xf0] sm:$0xf]
  %v79 = vld [vmem:[%s1 + $0xf4] sm:$0xf]
  %v80 = vld [vmem:[%s1 + $0xf8] sm:$0xf]
  %v81 = vld [vmem:[%s1 + $0xfc] sm:$0xf]
  %v82 = vld [vmem:[%s1 + $0x100] sm:$0xf]
  %v83 = vld [vmem:[%s1 + $0x104] sm:$0xf]
  %v84 = vld [vmem:[%s1 + $0x108] sm:$0xf]
  %v85 = vld [vmem:[%s1 + $0x10c] sm:$0xf]
  %v86 = vld [vmem:[%s1 + $0x110] sm:$0xf]
  %v87 = vld [vmem:[%s1 + $0x114] sm:$0xf]
  %v88 = vld [vmem:[%s1 + $0x118] sm:$0xf]
  %v89 = vld [vmem:[%s1 + $0x11c] sm:$0xf]
  %v90 = vld [vmem:[%s1 + $0x120] sm:$0xf]
  %v91 = vld [vmem:[%s1 + $0x124] sm:$0xf]
  %v92 = vld [vmem:[%s1 + $0x128] sm:$0xf]
  %v93 = vld [vmem:[%s1 + $0x12c] sm:$0xf]
  %v94 = vld [vmem:[%s1 + $0x130] sm:$0xf]
  %v95 = vld [vmem:[%s1 + $0x134] sm:$0xf]
  %v96 = vld [vmem:[%s1 + $0x138] sm:$0xf]
  %v97 = vld [vmem:[%s1 + $0x13c] sm:$0xf]
  %v98 = vld [vmem:[%s2] sm:$0x1]
  %v100 = vlaneseq
  %v101 = vshrl.u32 %v100, 7
  %v102 = vsub.s32 0, %v101
  %v103 = vrot.slane %v98, %v102
  %v108 = vunpack.c.l.b16 %v15
  %v109 = vunpack.c.h.b16 %v15
  %v110 = vunpack.c.l.b16 %v16
  %v111 = vunpack.c.h.b16 %v16
  %v112 = vunpack.c.l.b16 %v17
  %v113 = vpack.c.b16 %v108, %v108
  %v114 = vpack.c.b16 %v109, %v109
  %v115 = vpack.c.b16 %v110, %v110
  %v116 = vpack.c.b16 %v111, %v111
  %v117 = vpack.c.b16 %v112, %v112
  %v203 = vunpack.c.l.b16 %v18
  %v204 = vunpack.c.l.b16 %v19
  %v205 = vunpack.c.l.b16 %v20
  %v206 = vunpack.c.l.b16 %v21
  %v207 = vunpack.c.l.b16 %v22
  %v208 = vunpack.c.l.b16 %v23
  %v209 = vunpack.c.l.b16 %v24
  %v210 = vunpack.c.l.b16 %v25
  %v211 = vunpack.c.l.b16 %v26
  %v212 = vunpack.c.l.b16 %v27
  %v213 = vunpack.c.l.b16 %v28
  %v214 = vunpack.c.l.b16 %v29
  %v215 = vunpack.c.l.b16 %v30
  %v216 = vunpack.c.l.b16 %v31
  %v217 = vunpack.c.l.b16 %v32
  %v218 = vunpack.c.l.b16 %v33
  %v219 = vunpack.c.l.b16 %v34
  %v220 = vunpack.c.l.b16 %v35
  %v221 = vunpack.c.l.b16 %v36
  %v222 = vunpack.c.l.b16 %v37
  %v223 = vunpack.c.l.b16 %v38
  %v224 = vunpack.c.l.b16 %v39
  %v225 = vunpack.c.l.b16 %v40
  %v226 = vunpack.c.l.b16 %v41
  %v227 = vunpack.c.l.b16 %v42
  %v228 = vunpack.c.l.b16 %v43
  %v229 = vunpack.c.l.b16 %v44
  %v230 = vunpack.c.l.b16 %v45
  %v231 = vunpack.c.l.b16 %v46
  %v232 = vunpack.c.l.b16 %v47
  %v233 = vunpack.c.l.b16 %v48
  %v234 = vunpack.c.l.b16 %v49
  %v235 = vunpack.c.l.b16 %v50
  %v236 = vunpack.c.l.b16 %v51
  %v237 = vunpack.c.l.b16 %v52
  %v238 = vunpack.c.l.b16 %v53
  %v239 = vunpack.c.l.b16 %v54
  %v240 = vunpack.c.l.b16 %v55
  %v241 = vunpack.c.l.b16 %v56
  %v242 = vunpack.c.l.b16 %v57
  %v243 = vunpack.c.l.b16 %v58
  %v244 = vunpack.c.l.b16 %v59
  %v245 = vunpack.c.l.b16 %v60
  %v246 = vunpack.c.l.b16 %v61
  %v247 = vunpack.c.l.b16 %v62
  %v248 = vunpack.c.l.b16 %v63
  %v249 = vunpack.c.l.b16 %v64
  %v250 = vunpack.c.l.b16 %v65
  %v251 = vunpack.c.l.b16 %v66
  %v252 = vunpack.c.l.b16 %v67
  %v253 = vunpack.c.l.b16 %v68
  %v254 = vunpack.c.l.b16 %v69
  %v255 = vunpack.c.l.b16 %v70
  %v256 = vunpack.c.l.b16 %v71
  %v257 = vunpack.c.l.b16 %v72
  %v258 = vunpack.c.l.b16 %v73
  %v259 = vunpack.c.l.b16 %v74
  %v260 = vunpack.c.l.b16 %v75
  %v261 = vunpack.c.l.b16 %v76
  %v262 = vunpack.c.l.b16 %v77
  %v263 = vunpack.c.l.b16 %v78
  %v264 = vunpack.c.l.b16 %v79
  %v265 = vunpack.c.l.b16 %v80
  %v266 = vunpack.c.l.b16 %v81
  %v267 = vunpack.c.l.b16 %v82
  %v268 = vunpack.c.l.b16 %v83
  %v269 = vunpack.c.l.b16 %v84
  %v270 = vunpack.c.l.b16 %v85
  %v271 = vunpack.c.l.b16 %v86
  %v272 = vunpack.c.l.b16 %v87
  %v273 = vunpack.c.l.b16 %v88
  %v274 = vunpack.c.l.b16 %v89
  %v275 = vunpack.c.l.b16 %v90
  %v276 = vunpack.c.l.b16 %v91
  %v277 = vunpack.c.l.b16 %v92
  %v278 = vunpack.c.l.b16 %v93
  %v279 = vunpack.c.l.b16 %v94
  %v280 = vunpack.c.l.b16 %v95
  %v281 = vunpack.c.l.b16 %v96
  %v282 = vunpack.c.l.b16 %v97
  %v283 = vpack.c.b16 %v204, %v203
  %v284 = vpack.c.b16 %v206, %v205
  %v285 = vpack.c.b16 %v208, %v207
  %v286 = vpack.c.b16 %v210, %v209
  %v287 = vpack.c.b16 %v212, %v211
  %v288 = vpack.c.b16 %v214, %v213
  %v289 = vpack.c.b16 %v216, %v215
  %v290 = vpack.c.b16 %v218, %v217
  %v291 = vpack.c.b16 %v220, %v219
  %v292 = vpack.c.b16 %v222, %v221
  %v293 = vpack.c.b16 %v224, %v223
  %v294 = vpack.c.b16 %v226, %v225
  %v295 = vpack.c.b16 %v228, %v227
  %v296 = vpack.c.b16 %v230, %v229
  %v297 = vpack.c.b16 %v232, %v231
  %v298 = vpack.c.b16 %v234, %v233
  %v299 = vpack.c.b16 %v236, %v235
  %v300 = vpack.c.b16 %v238, %v237
  %v301 = vpack.c.b16 %v240, %v239
  %v302 = vpack.c.b16 %v242, %v241
  %v303 = vpack.c.b16 %v244, %v243
  %v304 = vpack.c.b16 %v246, %v245
  %v305 = vpack.c.b16 %v248, %v247
  %v306 = vpack.c.b16 %v250, %v249
  %v307 = vpack.c.b16 %v252, %v251
  %v308 = vpack.c.b16 %v254, %v253
  %v309 = vpack.c.b16 %v256, %v255
  %v310 = vpack.c.b16 %v258, %v257
  %v311 = vpack.c.b16 %v260, %v259
  %v312 = vpack.c.b16 %v262, %v261
  %v313 = vpack.c.b16 %v264, %v263
  %v314 = vpack.c.b16 %v266, %v265
  %v315 = vpack.c.b16 %v268, %v267
  %v316 = vpack.c.b16 %v270, %v269
  %v317 = vpack.c.b16 %v272, %v271
  %v318 = vpack.c.b16 %v274, %v273
  %v319 = vpack.c.b16 %v276, %v275
  %v320 = vpack.c.b16 %v278, %v277
  %v321 = vpack.c.b16 %v280, %v279
  %v322 = vpack.c.b16 %v282, %v281
  %363 = vmatprep.subr.bf16.mxu0 0
  %364 = vmatpush1.bf16.msra.mxu0 %v283
  %365 = vmatprep.subr.bf16.mxu0 0
  %366 = vmatpush1.bf16.msra.mxu0 %v284
  %367 = vmatprep.subr.bf16.mxu0 0
  %368 = vmatpush1.bf16.msra.mxu0 %v285
  %369 = vmatprep.subr.bf16.mxu0 0
  %370 = vmatpush1.bf16.msra.mxu0 %v286
  %371 = vmatprep.subr.bf16.mxu0 0
  %372 = vmatpush1.bf16.msra.mxu0 %v287
  %373 = vmatprep.subr.bf16.mxu0 0
  %374 = vmatpush1.bf16.msra.mxu0 %v288
  %375 = vmatprep.subr.bf16.mxu0 0
  %376 = vmatpush1.bf16.msra.mxu0 %v289
  %377 = vmatprep.subr.bf16.mxu0 0
  %378 = vmatpush1.bf16.msra.mxu0 %v290
  %379 = vmatprep.subr.bf16.mxu0 0
  %380 = vmatpush1.bf16.msra.mxu0 %v291
  %381 = vmatprep.subr.bf16.mxu0 0
  %382 = vmatpush1.bf16.msra.mxu0 %v292
  %383 = vmatprep.subr.bf16.mxu0 0
  %384 = vmatpush1.bf16.msra.mxu0 %v293
  %385 = vmatprep.subr.bf16.mxu0 0
  %386 = vmatpush1.bf16.msra.mxu0 %v294
  %387 = vmatprep.subr.bf16.mxu0 0
  %388 = vmatpush1.bf16.msra.mxu0 %v295
  %389 = vmatprep.subr.bf16.mxu0 0
  %390 = vmatpush1.bf16.msra.mxu0 %v296
  %391 = vmatprep.subr.bf16.mxu0 0
  %392 = vmatpush1.bf16.msra.mxu0 %v297
  %393 = vmatprep.subr.bf16.mxu0 0
  %394 = vmatpush1.bf16.msra.mxu0 %v298
  %395 = vmatprep.mubr.bf16.mxu0 %v114
  %396 = vmatmul.mubr.bf16.gmra.mrb[0].mxu0 %v113
  %v397 = vpop.f32.mrb[0].mxu0
  %v398 = vadd.f32 %v103, %v397
  %v399 = vpop.f32.mrb[0].mxu0
  %v400 = vpop.f32.mrb[0].mxu0
  %v401 = vpop.f32.mrb[0].mxu0
  %402 = vdwg.mxu0
  %403 = vmatprep.subr.bf16.mxu0 0
  %404 = vmatpush1.bf16.msra.mxu0 %v299
  %405 = vmatprep.subr.bf16.mxu0 0
  %406 = vmatpush1.bf16.msra.mxu0 %v300
  %407 = vmatprep.subr.bf16.mxu0 0
  %408 = vmatpush1.bf16.msra.mxu0 %v301
  %409 = vmatprep.subr.bf16.mxu0 0
  %410 = vmatpush1.bf16.msra.mxu0 %v302
  %411 = vmatprep.subr.bf16.mxu0 0
  %412 = vmatpush1.bf16.msra.mxu0 %v303
  %413 = vmatprep.subr.bf16.mxu0 0
  %414 = vmatpush1.bf16.msra.mxu0 %v304
  %415 = vmatprep.subr.bf16.mxu0 0
  %416 = vmatpush1.bf16.msra.mxu0 %v305
  %417 = vmatprep.subr.bf16.mxu0 0
  %418 = vmatpush1.bf16.msra.mxu0 %v306
  %419 = vmatprep.subr.bf16.mxu0 0
  %420 = vmatpush1.bf16.msra.mxu0 %v307
  %421 = vmatprep.subr.bf16.mxu0 0
  %422 = vmatpush1.bf16.msra.mxu0 %v308
  %423 = vmatprep.subr.bf16.mxu0 0
  %424 = vmatpush1.bf16.msra.mxu0 %v309
  %425 = vmatprep.subr.bf16.mxu0 0
  %426 = vmatpush1.bf16.msra.mxu0 %v310
  %427 = vmatprep.subr.bf16.mxu0 0
  %428 = vmatpush1.bf16.msra.mxu0 %v311
  %429 = vmatprep.subr.bf16.mxu0 0
  %430 = vmatpush1.bf16.msra.mxu0 %v312
  %431 = vmatprep.subr.bf16.mxu0 0
  %432 = vmatpush1.bf16.msra.mxu0 %v313
  %433 = vmatprep.subr.bf16.mxu0 0
  %434 = vmatpush1.bf16.msra.mxu0 %v314
  %435 = vmatprep.mubr.bf16.mxu0 %v116
  %436 = vmatmul.mubr.bf16.gmra.mrb[0].mxu0 %v115
  %v437 = vpop.f32.mrb[0].mxu0
  %v438 = vadd.f32 %v398, %v437
  %v439 = vpop.f32.mrb[0].mxu0
  %v440 = vpop.f32.mrb[0].mxu0
  %v441 = vpop.f32.mrb[0].mxu0
  %442 = vdwg.mxu0
  %443 = vmatprep.subr.bf16.mxu0 0
  %444 = vmatpush1.bf16.msra.mxu0 %v315
  %445 = vmatprep.subr.bf16.mxu0 0
  %446 = vmatpush1.bf16.msra.mxu0 %v316
  %447 = vmatprep.subr.bf16.mxu0 0
  %448 = vmatpush1.bf16.msra.mxu0 %v317
  %449 = vmatprep.subr.bf16.mxu0 0
  %450 = vmatpush1.bf16.msra.mxu0 %v318
  %451 = vmatprep.subr.bf16.mxu0 0
  %452 = vmatpush1.bf16.msra.mxu0 %v319
  %453 = vmatprep.subr.bf16.mxu0 0
  %454 = vmatpush1.bf16.msra.mxu0 %v320
  %455 = vmatprep.subr.bf16.mxu0 0
  %456 = vmatpush1.bf16.msra.mxu0 %v321
  %457 = vmatprep.subr.bf16.mxu0 0
  %458 = vmatpush1.bf16.msra.mxu0 %v322
  %459 = vmatprep.subr.bf16.mxu0 0
  %460 = vmatpush1.bf16.msra.mxu0 0
  %461 = vmatprep.subr.bf16.mxu0 0
  %462 = vmatpush1.bf16.msra.mxu0 0
  %463 = vmatprep.subr.bf16.mxu0 0
  %464 = vmatpush1.bf16.msra.mxu0 0
  %465 = vmatprep.subr.bf16.mxu0 0
  %466 = vmatpush1.bf16.msra.mxu0 0
  %467 = vmatprep.subr.bf16.mxu0 0
  %468 = vmatpush1.bf16.msra.mxu0 0
  %469 = vmatprep.subr.bf16.mxu0 0
  %470 = vmatpush1.bf16.msra.mxu0 0
  %471 = vmatprep.subr.bf16.mxu0 0
  %472 = vmatpush1.bf16.msra.mxu0 0
  %473 = vmatprep.subr.bf16.mxu0 0
  %474 = vmatpush1.bf16.msra.mxu0 0
  %475 = vmatprep.mubr.bf16.mxu0 0
  %476 = vmatmul.mubr.bf16.gmra.mrb[0].mxu0 %v117
  %v477 = vpop.f32.mrb[0].mxu0
  %v478 = vadd.f32 %v438, %v477
  %v479 = vpop.f32.mrb[0].mxu0
  %v480 = vpop.f32.mrb[0].mxu0
  %v481 = vpop.f32.mrb[0].mxu0
  %482 = vdwg.mxu0
  %v483 = vmax.f32 %v478, 0.0
  %v484 = vpack.c.bf16 %v483, %v483
  %vm485 = vcmask 519168
  %486 = vst.msk [vmem:[%s3] sm:$0xf] %vm485, %v484
  // Predicated region
  $region14: #{_lambda_.6} parent=0 // pred_check
    _
  $region15: #{_lambda_.6} parent=0 // pred_check_branch
    %488 = sbr.rel (0) target = $region17
  $region16: #{_lambda_.6} parent=0 // pred_region
    _
  $region17: #{_lambda_.6} parent=0 // pred_fallthru
    _
  // Predicated region
  $region18: #{_lambda_.6} parent=0 // pred_check
    _
  $region19: #{_lambda_.6} parent=0 // pred_check_branch
    %490 = sbr.rel (0) target = $region21
  $region20: #{_lambda_.6} parent=0 // pred_region
    _
  $region21: #{_lambda_.6} parent=0 // pred_fallthru
    _

// kernel: _lambda_.7
$region0: #{_lambda_.7}
  #allocation0 [shape = 'u32[]', space=smem, size = 0x4, offset = 0x4, fixed_abs, tag = 'smem constant byte address 0x4 - core index']
  #allocation1 [shape = 'u32[144,128]{1,0:T(1,128)}', space=vmem, size = 0x12000, scoped, tag = 'internal scratch']
  %s0 = inlined_call_operand.vmem [shape: bf16[2,256], index: 0, kind: input, shape index: {}]
  %s1 = inlined_call_operand.vmem [shape: bf16[256,32], index: 1, kind: input, shape index: {}]
  %s2 = inlined_call_operand.vmem [shape: f32[1,32], index: 2, kind: input, shape index: {}]
  %s3 = inlined_call_operand.hbm [shape: f32[2,32], index: 3, kind: output, shape index: {}]
  %s4 = sld [smem:[#allocation0]]
  $region22: #{_lambda_.7} parent=0
    _
  %s6 = ssub.s32 1, %s4
  %s7 = scalar_select 0, %s6, %s4
  $region1: #{_lambda_.7} parent=0
    #allocation2 [shape = 'u8[1024]{0}', space=vmem, size = 0x400, scoped, tag = 'output window, operand 0, single buffered']
    #allocation3 [shape = 's32[1]{0}', space=sflag, size = 0x4, scoped, tag = 'scoped memory for _lambda_.7']
    %8 = vsyncpa [#allocation3], 0
    // Predicated region
    $region2: #{_lambda_.7} parent=1 // pred_check
      _
    $region3: #{_lambda_.7} parent=1 // pred_check_branch
      %10 = sbr.rel (0) target = $region5
    $region4: #{_lambda_.7} parent=1 // pred_region
      _
    $region5: #{_lambda_.7} parent=1 // pred_fallthru
      _
    // Predicated region
    $region6: #{_lambda_.7} parent=1 // pred_check
      _
    $region7: #{_lambda_.7} parent=1 // pred_check_branch
      %12 = sbr.rel (0) target = $region9
    $region8: #{_lambda_.7} parent=1 // pred_region
      _
    $region9: #{_lambda_.7} parent=1 // pred_fallthru
      _
    // Predicated region
    $region10: #{_lambda_.7} parent=1 // pred_check
      _
    $region11: #{_lambda_.7} parent=1 // pred_check_branch
      %14 = sbr.rel (0) target = $region13
    $region12: #{_lambda_.7} parent=1 // pred_region
      _
    $region13: #{_lambda_.7} parent=1 // pred_fallthru
      _
    %v16 = vld [vmem:[%s0] sm:$0x3]
    %v17 = vld [vmem:[%s1] sm:$0xf]
    %v18 = vld [vmem:[%s1 + $0x4] sm:$0xf]
    %v19 = vld [vmem:[%s1 + $0x8] sm:$0xf]
    %v20 = vld [vmem:[%s1 + $0xc] sm:$0xf]
    %v21 = vld [vmem:[%s1 + $0x10] sm:$0xf]
    %v22 = vld [vmem:[%s1 + $0x14] sm:$0xf]
    %v23 = vld [vmem:[%s1 + $0x18] sm:$0xf]
    %v24 = vld [vmem:[%s1 + $0x1c] sm:$0xf]
    %v25 = vld [vmem:[%s1 + $0x20] sm:$0xf]
    %v26 = vld [vmem:[%s1 + $0x24] sm:$0xf]
    %v27 = vld [vmem:[%s1 + $0x28] sm:$0xf]
    %v28 = vld [vmem:[%s1 + $0x2c] sm:$0xf]
    %v29 = vld [vmem:[%s1 + $0x30] sm:$0xf]
    %v30 = vld [vmem:[%s1 + $0x34] sm:$0xf]
    %v31 = vld [vmem:[%s1 + $0x38] sm:$0xf]
    %v32 = vld [vmem:[%s1 + $0x3c] sm:$0xf]
    %v33 = vld [vmem:[%s1 + $0x40] sm:$0xf]
    %v34 = vld [vmem:[%s1 + $0x44] sm:$0xf]
    %v35 = vld [vmem:[%s1 + $0x48] sm:$0xf]
    %v36 = vld [vmem:[%s1 + $0x4c] sm:$0xf]
    %v37 = vld [vmem:[%s1 + $0x50] sm:$0xf]
    %v38 = vld [vmem:[%s1 + $0x54] sm:$0xf]
    %v39 = vld [vmem:[%s1 + $0x58] sm:$0xf]
    %v40 = vld [vmem:[%s1 + $0x5c] sm:$0xf]
    %v41 = vld [vmem:[%s1 + $0x60] sm:$0xf]
    %v42 = vld [vmem:[%s1 + $0x64] sm:$0xf]
    %v43 = vld [vmem:[%s1 + $0x68] sm:$0xf]
    %v44 = vld [vmem:[%s1 + $0x6c] sm:$0xf]
    %v45 = vld [vmem:[%s1 + $0x70] sm:$0xf]
    %v46 = vld [vmem:[%s1 + $0x74] sm:$0xf]
    %v47 = vld [vmem:[%s1 + $0x78] sm:$0xf]
    %v48 = vld [vmem:[%s1 + $0x7c] sm:$0xf]
    %v49 = vld [vmem:[%s2] sm:$0x1]
    %v51 = vlaneseq
    %v52 = vshrl.u32 %v51, 7
    %v53 = vsub.s32 0, %v52
    %v54 = vrot.slane %v49, %v53
    %v58 = vunpack.c.l.s4 1966171168
    %v59 = vunpack.c.0.s8 %v58
    %v60 = vlaneseq
    %v61 = vshrl.u32 %v60, 7
    %v62 = vsub.s32 %v59, %v61
    %v63 = vrot.slane %v16, %v62
    %v64 = vcombine.high %v63, %v63
    %v66 = vunpack.c.l.s4 1966171168
    %v67 = vunpack.c.0.s8 %v66
    %v68 = vlaneseq
    %v69 = vshrl.u32 %v68, 7
    %v70 = vsub.s32 %v67, %v69
    %v71 = vrot.slane %v63, %v70
    %v73 = vunpack.c.l.s4 1966171168
    %v74 = vunpack.c.0.s8 %v73
    %v75 = vlaneseq
    %v76 = vshrl.u32 %v75, 7
    %v77 = vsub.s32 %v74, %v76
    %v78 = vrot.slane %v64, %v77
    %v113 = vunpack.c.l.b16 %v17
    %v114 = vunpack.c.l.b16 %v18
    %v115 = vunpack.c.l.b16 %v19
    %v116 = vunpack.c.l.b16 %v20
    %v117 = vunpack.c.l.b16 %v21
    %v118 = vunpack.c.l.b16 %v22
    %v119 = vunpack.c.l.b16 %v23
    %v120 = vunpack.c.l.b16 %v24
    %v121 = vunpack.c.l.b16 %v25
    %v122 = vunpack.c.l.b16 %v26
    %v123 = vunpack.c.l.b16 %v27
    %v124 = vunpack.c.l.b16 %v28
    %v125 = vunpack.c.l.b16 %v29
    %v126 = vunpack.c.l.b16 %v30
    %v127 = vunpack.c.l.b16 %v31
    %v128 = vunpack.c.l.b16 %v32
    %v129 = vunpack.c.l.b16 %v33
    %v130 = vunpack.c.l.b16 %v34
    %v131 = vunpack.c.l.b16 %v35
    %v132 = vunpack.c.l.b16 %v36
    %v133 = vunpack.c.l.b16 %v37
    %v134 = vunpack.c.l.b16 %v38
    %v135 = vunpack.c.l.b16 %v39
    %v136 = vunpack.c.l.b16 %v40
    %v137 = vunpack.c.l.b16 %v41
    %v138 = vunpack.c.l.b16 %v42
    %v139 = vunpack.c.l.b16 %v43
    %v140 = vunpack.c.l.b16 %v44
    %v141 = vunpack.c.l.b16 %v45
    %v142 = vunpack.c.l.b16 %v46
    %v143 = vunpack.c.l.b16 %v47
    %v144 = vunpack.c.l.b16 %v48
    %v145 = vpack.c.b16 %v114, %v113
    %v146 = vpack.c.b16 %v116, %v115
    %v147 = vpack.c.b16 %v118, %v117
    %v148 = vpack.c.b16 %v120, %v119
    %v149 = vpack.c.b16 %v122, %v121
    %v150 = vpack.c.b16 %v124, %v123
    %v151 = vpack.c.b16 %v126, %v125
    %v152 = vpack.c.b16 %v128, %v127
    %v153 = vpack.c.b16 %v130, %v129
    %v154 = vpack.c.b16 %v132, %v131
    %v155 = vpack.c.b16 %v134, %v133
    %v156 = vpack.c.b16 %v136, %v135
    %v157 = vpack.c.b16 %v138, %v137
    %v158 = vpack.c.b16 %v140, %v139
    %v159 = vpack.c.b16 %v142, %v141
    %v160 = vpack.c.b16 %v144, %v143
    %177 = vmatprep.subr.bf16.mxu0 0
    %178 = vmatpush1.bf16.msra.mxu0 %v145
    %179 = vmatprep.subr.bf16.mxu0 0
    %180 = vmatpush1.bf16.msra.mxu0 %v146
    %181 = vmatprep.subr.bf16.mxu0 0
    %182 = vmatpush1.bf16.msra.mxu0 %v147
    %183 = vmatprep.subr.bf16.mxu0 0
    %184 = vmatpush1.bf16.msra.mxu0 %v148
    %185 = vmatprep.subr.bf16.mxu0 0
    %186 = vmatpush1.bf16.msra.mxu0 %v149
    %187 = vmatprep.subr.bf16.mxu0 0
    %188 = vmatpush1.bf16.msra.mxu0 %v150
    %189 = vmatprep.subr.bf16.mxu0 0
    %190 = vmatpush1.bf16.msra.mxu0 %v151
    %191 = vmatprep.subr.bf16.mxu0 0
    %192 = vmatpush1.bf16.msra.mxu0 %v152
    %193 = vmatprep.subr.bf16.mxu0 0
    %194 = vmatpush1.bf16.msra.mxu0 %v153
    %195 = vmatprep.subr.bf16.mxu0 0
    %196 = vmatpush1.bf16.msra.mxu0 %v154
    %197 = vmatprep.subr.bf16.mxu0 0
    %198 = vmatpush1.bf16.msra.mxu0 %v155
    %199 = vmatprep.subr.bf16.mxu0 0
    %200 = vmatpush1.bf16.msra.mxu0 %v156
    %201 = vmatprep.subr.bf16.mxu0 0
    %202 = vmatpush1.bf16.msra.mxu0 %v157
    %203 = vmatprep.subr.bf16.mxu0 0
    %204 = vmatpush1.bf16.msra.mxu0 %v158
    %205 = vmatprep.subr.bf16.mxu0 0
    %206 = vmatpush1.bf16.msra.mxu0 %v159
    %207 = vmatprep.subr.bf16.mxu0 0
    %208 = vmatpush1.bf16.msra.mxu0 %v160
    %209 = vmatprep.mubr.bf16.mxu0 %v78
    %210 = vmatmul.mubr.bf16.gmra.mrb[0].mxu0 %v71
    %v211 = vpop.f32.mrb[0].mxu0
    %v212 = vadd.f32 %v54, %v211
    %v213 = vpop.f32.mrb[0].mxu0
    %v214 = vpop.f32.mrb[0].mxu0
    %v215 = vpop.f32.mrb[0].mxu0
    %216 = vdwg.mxu0
    %vm217 = vcmask 254976
    %218 = vst.msk [vmem:[#allocation2] sm:$0x3] %vm217, %v212
    // Predicated region
    $region14: #{_lambda_.7} parent=1 // pred_check
      _
    $region15: #{_lambda_.7} parent=1 // pred_check_branch
      %220 = sbr.rel (0) target = $region17
    $region16: #{_lambda_.7} parent=1 // pred_region
      %s222 = ssub.s32 32, 32
      %223 = vsyncadd [#allocation3], %s222
      %s225 = sshll.u32 [#allocation2], 4
      %s226 = int_to_ptr.vmem [resolvable:$true] %s225
      %228 = dma.vmem_to_hbm [thread:$0]  %s226, 32, %s3, [#allocation3]
    $region17: #{_lambda_.7} parent=1 // pred_fallthru
      _
    // Predicated region
    $region18: #{_lambda_.7} parent=1 // pred_check
      _
    $region19: #{_lambda_.7} parent=1 // pred_check_branch
      %230 = sbr.rel (0) target = $region21
    $region20: #{_lambda_.7} parent=1 // pred_region
      %231 = dma.done [#allocation3], 32
    $region21: #{_lambda_.7} parent=1 // pred_fallthru
      _
    %232 = vsyncpa [#allocation3], 1

</llo_original>
